<compile_context>
chip_gen: v6e
topology: v6e:2x2x1
jax: 0.10.0
libtpu: 0.0.40
codegen_flags: <defaults>
</compile_context>

<pallas_src>
import functools

import jax
import jax.numpy as jnp
from jax.experimental import pallas as pl
from jax.experimental.pallas import tpu as pltpu

BN_EPS = 1e-3


def _decoder_totalvi_kernel(
    # resident inputs (fetched once; constant block index)
    z_ref, lib_ref, eps_ref,
    wd_ref, bd_ref, gd_ref, betad_ref,
    wpb_ref, bpb_ref, wpf_ref, bpf_ref, wpm_ref, bpm_ref,
    # gene-head inputs streamed over G tiles (already [h ; z]-fused, K = H + D)
    wgs_ref, bgs_ref, wgd_ref, bgd_ref,
    # outputs
    px_scale_ref, px_rate_ref, px_dropout_ref, prot_ref,
    # scratch
    hzs_ref, hzd_ref, m_ref, l_ref, *opt_scratch,
    n_hidden, n_proteins, tile_g, cache_logits, stream_dtype,
):
    f32 = jnp.float32
    H, P = n_hidden, n_proteins
    pass_id = pl.program_id(0)          # 0 = logits/stats pass, 1 = emit pass
    g = pl.program_id(1)                # gene tile index
    logits_scr = opt_scratch[0] if cache_logits else None

    # ---- first grid step: fused stem (4x Linear->BN(train)->ReLU) + protein heads
    @pl.when(jnp.logical_and(pass_id == 0, g == 0))
    def _stem():
        z = z_ref[...]                  # (B, D)
        h = jnp.dot(z, wd_ref[...], preferred_element_type=f32) + bd_ref[...]
        mu = jnp.mean(h, axis=0, keepdims=True)
        var = jnp.mean((h - mu) ** 2, axis=0, keepdims=True)    # biased variance
        h = (h - mu) * jax.lax.rsqrt(var + BN_EPS)
        h = jnp.maximum(h * gd_ref[...] + betad_ref[...], 0.0)  # (B, 4H)
        h0 = h[:, :H]            # px decoder block
        h1 = h[:, H:2 * H]       # py_back decoder block
        h2 = h[:, 2 * H:3 * H]   # py_fore decoder block
        h3 = h[:, 3 * H:]        # sigmoid decoder block

        # [h ; z] built ONCE and cast ONCE to the streaming dtype (bf16), so the
        # steady-state tile body is a single K=(H+D) MXU dot with no VPU casts.
        hzs_ref[...] = jnp.concatenate([h0, z], axis=-1).astype(stream_dtype)
        hzd_ref[...] = jnp.concatenate([h3, z], axis=-1).astype(stream_dtype)
        m_ref[...] = jnp.full_like(m_ref, -jnp.inf)
        l_ref[...] = jnp.zeros_like(l_ref)

        # ---- protein heads (small; done here so they overlap gene-weight DMA) ---
        hz1 = jnp.concatenate([h1, z], axis=-1)
        hz2 = jnp.concatenate([h2, z], axis=-1)
        hz3 = jnp.concatenate([h3, z], axis=-1)
        ab = jnp.dot(hz1, wpb_ref[...], preferred_element_type=f32) + bpb_ref[...]
        back_alpha = ab[:, :P]
        back_beta = jnp.exp(ab[:, P:])
        log_back = back_alpha + back_beta * eps_ref[...]        # Normal(a,b).rsample()
        rate_back = jnp.exp(log_back)
        fore_scale = jnp.maximum(
            jnp.dot(hz2, wpf_ref[...], preferred_element_type=f32) + bpf_ref[...],
            0.0) + (1.0 + 1e-8)
        rate_fore = rate_back * fore_scale
        mixing = jnp.dot(hz3, wpm_ref[...], preferred_element_type=f32) + bpm_ref[...]
        # numerically safe sigmoid; approx reciprocal stays on the EUP slot
        protein_mixing = pl.reciprocal(
            1.0 + jnp.exp(jnp.clip(-mixing, -60.0, 60.0)), approx=True)
        unnorm = (1.0 - protein_mixing) * rate_fore
        l1 = jnp.maximum(jnp.sum(jnp.abs(unnorm), axis=-1, keepdims=True), 1e-12)
        py_scale = unnorm * (1.0 / l1)                          # exact per-row divide
        prot_ref[...] = jnp.concatenate(
            [back_alpha, back_beta, rate_back, fore_scale, rate_fore,
             mixing, py_scale, log_back], axis=-1)

    # ---- pass 0: scale-head logits for this tile + online softmax statistics ----
    @pl.when(pass_id == 0)
    def _stats():
        logits = (jnp.dot(hzs_ref[...], wgs_ref[...], preferred_element_type=f32)
                  + bgs_ref[...])
        if cache_logits:
            col = pl.multiple_of(g * tile_g, 128)
            logits_scr[:, pl.ds(col, tile_g)] = logits
        m_prev = m_ref[...]
        m_new = jnp.maximum(m_prev, jnp.max(logits, axis=-1, keepdims=True))
        l_ref[...] = (l_ref[...] * jnp.exp(m_prev - m_new)
                      + jnp.sum(jnp.exp(logits - m_new), axis=-1, keepdims=True))
        m_ref[...] = m_new

    # ---- pass 1: emit normalized scale / rate and the dropout head --------------
    @pl.when(pass_id == 1)
    def _emit():
        if cache_logits:
            col = pl.multiple_of(g * tile_g, 128)
            logits = logits_scr[:, pl.ds(col, tile_g)]
        else:
            logits = (jnp.dot(hzs_ref[...], wgs_ref[...], preferred_element_type=f32)
                      + bgs_ref[...])
        inv_l = 1.0 / l_ref[...]          # exact B-length divide: rows sum to 1
        scale = jnp.exp(logits - m_ref[...]) * inv_l
        px_scale_ref[...] = scale
        px_rate_ref[...] = lib_ref[...] * scale                  # library_gene * scale
        px_dropout_ref[...] = (
            jnp.dot(hzd_ref[...], wgd_ref[...], preferred_element_type=f32)
            + bgd_ref[...])


def _round_up(x, m):
    return -(-int(x) // m) * m


def _physical_vmem_bytes():
    try:
        return int(pltpu.get_tpu_info().vmem_capacity_bytes)
    except Exception:
        try:
            kind = jax.devices()[0].device_kind.lower()
        except Exception:
            kind = ""
        return (64 << 20) if "v7" in kind else (128 << 20)


def decoder_totalvi_forward(z, library_gene, eps, params, *,
                            tile_g=None,                 # None -> generation-aware pick
                            stream_dtype=jnp.bfloat16,   # bf16 streaming by default
                            gene_stream_buffers=None):   # set 3 on v5e (deeper prefetch)
    f32 = jnp.float32
    B, D = z.shape
    n_blocks, _, H = params["wd"].shape                  # (4, D, H)
    G = params["wg"].shape[2]
    P = params["wp"].shape[2]
    assert n_blocks == 4

    # ------------------ generation-aware tiling & VMEM budget --------------------
    vmem_phys = _physical_vmem_bytes()
    vmem_cap = (vmem_phys * 3) // 4        # never request the whole TC VMEM
    if tile_g is None:
        tile_g = 512 if vmem_phys <= (64 << 20) else 1024
    tile_g = max(128, _round_up(tile_g, 128))
    tile_g = min(tile_g, _round_up(G, 128))
    n_gt = -(-G // tile_g)
    Gp = n_gt * tile_g

    # ------------------ wrapper-side layout plumbing (no kernel compute) ---------
    # fused decoder blocks: (4, D, H) -> (D, 4H), block-major columns
    wd_all = jnp.transpose(params["wd"], (1, 0, 2)).reshape(D, 4 * H).astype(f32)
    bd_all = params["bd"].reshape(1, 4 * H).astype(f32)
    gd_all = params["gd"].reshape(1, 4 * H).astype(f32)
    betad_all = params["betad"].reshape(1, 4 * H).astype(f32)

    # protein heads ordered [back_alpha, back_beta, fore_scale, mixing]; K = H + D
    wp = params["wp"].astype(f32)                        # (4, H+D, P)
    bp = params["bp"].astype(f32)                        # (4, 1, P)
    wpb = jnp.concatenate([wp[0], wp[1]], axis=-1)       # (H+D, 2P)
    bpb = jnp.concatenate([bp[0], bp[1]], axis=-1)       # (1, 2P)
    wpf, bpf = wp[2], bp[2]
    wpm, bpm = wp[3], bp[3]

    # gene heads kept [h ; z]-fused (K = H + D); pad G to a tile multiple
    wg = params["wg"].astype(f32)                        # (2, H+D, G)
    bg = params["bg"].astype(f32)                        # (2, 1, G)

    def pad_cols(a, value=0.0):
        padn = Gp - a.shape[-1]
        if padn == 0:
            return a
        return jnp.pad(a, [(0, 0)] * (a.ndim - 1) + [(0, padn)], constant_values=value)

    wgs = pad_cols(wg[0]).astype(stream_dtype)           # (H+D, Gp)  px_scale head
    bgs = pad_cols(bg[0], value=-1e30)                   # padded logits -> exp == 0
    wgd = pad_cols(wg[1]).astype(stream_dtype)           # px_dropout head
    bgd = pad_cols(bg[1])

    z = z.astype(f32)
    library_gene = library_gene.astype(f32)
    eps = eps.astype(f32)

    # ------------------ VMEM need & logits-cache decision ------------------------
    def nbytes(a):
        return int(a.size) * a.dtype.itemsize

    resident = (z, library_gene, eps, wd_all, bd_all, gd_all, betad_all,
                wpb, bpb, wpf, bpf, wpm, bpm)
    resident_bytes = 2 * sum(nbytes(a) for a in resident)
    s_item = jnp.dtype(stream_dtype).itemsize
    nbuf = 2 if gene_stream_buffers is None else int(gene_stream_buffers)
    stream_bytes = 2 * ((H + D) * tile_g * s_item + tile_g * 4) * nbuf
    out_bytes = 2 * (3 * B * tile_g * 4 + B * 8 * P * 4)
    hz_bytes = 2 * B * (H + D) * s_item + 2 * B * 4
    work_bytes = 2 * B * tile_g * 4                      # live f32 logits (may spill)
    headroom = 4 << 20
    base_need = (resident_bytes + stream_bytes + out_bytes + hz_bytes
                 + work_bytes + headroom)
    logits_cache_bytes = B * Gp * 4
    cache_logits = (base_need + logits_cache_bytes) <= vmem_cap
    need = base_need + (logits_cache_bytes if cache_logits else 0)
    vmem_limit = int(min(max(need, 32 << 20), vmem_cap))

    # ------------------ specs ----------------------------------------------------
    def res(shape):                                      # resident (fetched once)
        return pl.BlockSpec(shape, lambda p, g: (0, 0))

    def stream_spec(rows, idx):
        if gene_stream_buffers is None:
            return pl.BlockSpec((rows, tile_g), idx)
        return pl.BlockSpec((rows, tile_g), idx,
                            pipeline_mode=pl.Buffered(int(gene_stream_buffers)))

    last = n_gt - 1
    if cache_logits:
        # scale head only needed in pass 0; park on the last tile in pass 1 (no refetch)
        idx_scale = lambda p, g: (0, g * (1 - p) + last * p)
    else:
        idx_scale = lambda p, g: (0, g)                  # streamed in both passes
    idx_drop = lambda p, g: (0, g * p)                   # parked on tile 0 in pass 0

    in_specs = [
        res((B, D)),              # z
        res((B, 1)),              # library_gene
        res((B, P)),              # eps
        res((D, 4 * H)),          # wd_all
        res((1, 4 * H)),          # bd_all
        res((1, 4 * H)),          # gd_all
        res((1, 4 * H)),          # betad_all
        res((H + D, 2 * P)),      # wpb
        res((1, 2 * P)),          # bpb
        res((H + D, P)),          # wpf
        res((1, P)),              # bpf
        res((H + D, P)),          # wpm
        res((1, P)),              # bpm
        stream_spec(H + D, idx_scale),   # wgs
        stream_spec(1, idx_scale),       # bgs
        stream_spec(H + D, idx_drop),    # wgd
        stream_spec(1, idx_drop),        # bgd
    ]
    out_specs = [
        pl.BlockSpec((B, tile_g), lambda p, g: (0, g * p)),   # px_scale
        pl.BlockSpec((B, tile_g), lambda p, g: (0, g * p)),   # px_rate
        pl.BlockSpec((B, tile_g), lambda p, g: (0, g * p)),   # px_dropout
        pl.BlockSpec((B, 8 * P), lambda p, g: (0, 0)),        # packed protein outputs
    ]
    out_shape = (
        jax.ShapeDtypeStruct((B, Gp), f32),
        jax.ShapeDtypeStruct((B, Gp), f32),
        jax.ShapeDtypeStruct((B, Gp), f32),
        jax.ShapeDtypeStruct((B, 8 * P), f32),
    )
    scratch_shapes = [
        pltpu.VMEM((B, H + D), stream_dtype),   # [h0 ; z]  (px_scale head input)
        pltpu.VMEM((B, H + D), stream_dtype),   # [h3 ; z]  (px_dropout head input)
        pltpu.VMEM((B, 1), f32),                # running softmax max
        pltpu.VMEM((B, 1), f32),                # running softmax exp-sum
    ]
    if cache_logits:
        scratch_shapes.append(pltpu.VMEM((B, Gp), f32))       # cached scale logits

    # ------------------ cost estimate -------------------------------------------
    scale_passes = 1 if cache_logits else 2
    flops = int(2 * B * D * 4 * H                        # fused stem matmul
                + 2 * B * (H + D) * 4 * P                # protein heads
                + (scale_passes + 1) * 2 * B * (H + D) * Gp)   # gene heads
    transcendentals = int(B * (2 * Gp + 6 * P))
    bytes_accessed = int(sum(nbytes(a) for a in resident)
                         + scale_passes * (nbytes(wgs) + nbytes(bgs))
                         + nbytes(wgd) + nbytes(bgd)
                         + 3 * B * Gp * 4 + B * 8 * P * 4)

    fn = pl.pallas_call(
        functools.partial(_decoder_totalvi_kernel,
                          n_hidden=H, n_proteins=P, tile_g=tile_g,
                          cache_logits=cache_logits, stream_dtype=stream_dtype),
        out_shape=out_shape,
        grid=(2, n_gt),
        in_specs=in_specs,
        out_specs=out_specs,
        scratch_shapes=scratch_shapes,
        compiler_params=pltpu.CompilerParams(
            # TODO(synk): on v7x split the gene axis core-parallel across the two
            # TensorCores with per-core (m,l) partials merged via VMEM_SHARED; the
            # single-core softmax reduction here forces "arbitrary" semantics.
            dimension_semantics=("arbitrary", "arbitrary"),
            vmem_limit_bytes=vmem_limit),
        cost_estimate=pl.CostEstimate(
            flops=flops, transcendentals=transcendentals,
            bytes_accessed=bytes_accessed),
    )
    px_scale, px_rate, px_dropout, prot = fn(
        z, library_gene, eps,
        wd_all, bd_all, gd_all, betad_all,
        wpb, bpb, wpf, bpf, wpm, bpm,
        wgs, bgs, wgd, bgd)

    # ------------------ unpack (layout plumbing only) ----------------------------
    px_ = {"scale": px_scale[:, :G], "rate": px_rate[:, :G], "dropout": px_dropout[:, :G]}

    def sl(i):
        return prot[:, i * P:(i + 1) * P]

    py_ = {
        "back_alpha": sl(0), "back_beta": sl(1), "rate_back": sl(2),
        "fore_scale": sl(3), "rate_fore": sl(4), "mixing": sl(5), "scale": sl(6),
    }
    log_pro_back_mean = sl(7)
    return px_, py_, log_pro_back_mean


def decoder_totalvi_reference(z, library_gene, eps, params):
    """Pure-JAX reference (mirrors the PyTorch module, training-mode BN)."""
    def block(idx):
        h = z @ params["wd"][idx] + params["bd"][idx]
        mu = h.mean(0, keepdims=True)
        var = ((h - mu) ** 2).mean(0, keepdims=True)
        h = (h - mu) / jnp.sqrt(var + BN_EPS)
        h = jnp.maximum(h * params["gd"][idx] + params["betad"][idx], 0.0)
        return jnp.concatenate([h, z], axis=-1)

    px_cat = block(0)
    px_scale = jax.nn.softmax(px_cat @ params["wg"][0] + params["bg"][0], axis=-1)
    px_rate = library_gene * px_scale
    back_cat = block(1)
    back_alpha = back_cat @ params["wp"][0] + params["bp"][0]
    back_beta = jnp.exp(back_cat @ params["wp"][1] + params["bp"][1])
    log_back = back_alpha + back_beta * eps
    rate_back = jnp.exp(log_back)
    fore_cat = block(2)
    fore_scale = jnp.maximum(fore_cat @ params["wp"][2] + params["bp"][2], 0.0) + 1.0 + 1e-8
    rate_fore = rate_back * fore_scale
    mix_cat = block(3)
    px_dropout = mix_cat @ params["wg"][1] + params["bg"][1]
    mixing = mix_cat @ params["wp"][3] + params["bp"][3]
    pm = jax.nn.sigmoid(mixing)
    unnorm = (1.0 - pm) * rate_fore
    py_scale = unnorm / jnp.maximum(jnp.sum(jnp.abs(unnorm), -1, keepdims=True), 1e-12)
    px_ = {"scale": px_scale, "rate": px_rate, "dropout": px_dropout}
    py_ = {"back_alpha": back_alpha, "back_beta": back_beta, "rate_back": rate_back,
           "fore_scale": fore_scale, "rate_fore": rate_fore, "mixing": mixing,
           "scale": py_scale}
    return px_, py_, log_back


def init_params(key, n_input, n_hidden, n_genes, n_proteins):
    """Deterministic synthetic parameters (PyTorch-like U(-1/sqrt(fan_in), +) init)."""
    f32 = jnp.float32
    ks = jax.random.split(key, 8)
    HD = n_hidden + n_input

    def unif(k, shape, fan_in):
        bound = 1.0 / jnp.sqrt(jnp.asarray(fan_in, f32))
        return jax.random.uniform(k, shape, f32, -bound, bound)

    return {
        # 4 decoder blocks: px, py_back, py_fore, sigmoid   (Linear + BN affine)
        "wd": unif(ks[0], (4, n_input, n_hidden), n_input),
        "bd": unif(ks[1], (4, 1, n_hidden), n_input),
        "gd": jnp.ones((4, 1, n_hidden), f32),
        "betad": jnp.zeros((4, 1, n_hidden), f32),
        # 2 gene heads: px_scale_decoder, px_dropout_decoder_gene
        "wg": unif(ks[2], (2, HD, n_genes), HD),
        "bg": unif(ks[3], (2, 1, n_genes), HD),
        # 4 protein heads: back_alpha, back_beta, fore_scale, background(mixing)
        "wp": unif(ks[4], (4, HD, n_proteins), HD),
        "bp": unif(ks[5], (4, 1, n_proteins), HD),
    }


if __name__ == "__main__":
    # small demo shapes; n_genes deliberately not a tile multiple to exercise padding
    B, n_input, n_hidden = 8, 16, 32
    n_genes, n_proteins = 192, 32

    key = jax.random.PRNGKey(0)
    k_z, k_lib, k_eps, k_par = jax.random.split(key, 4)
    z = jax.random.normal(k_z, (B, n_input), jnp.float32)
    library_gene = jnp.exp(jax.random.normal(k_lib, (B, 1), jnp.float32)) * 100.0
    eps = jax.random.normal(k_eps, (B, n_proteins), jnp.float32)   # rsample noise
    params = init_params(k_par, n_input, n_hidden, n_genes, n_proteins)

    px_, py_, log_back = decoder_totalvi_forward(z, library_gene, eps, params)
    jax.block_until_ready((px_, py_, log_back))

    # pure-JAX reference check
    rpx, rpy, rlog = decoder_totalvi_reference(z, library_gene, eps, params)

    def check(a, b, name, rtol, atol):
        assert a.shape == b.shape, f"shape mismatch: {name}"
        assert bool(jnp.allclose(a, b, rtol=rtol, atol=atol)), f"value mismatch: {name}"

    # gene heads are streamed in bf16 -> slightly looser tolerance
    check(px_["scale"], rpx["scale"], "px_scale", rtol=2e-2, atol=5e-3)
    check(px_["rate"], rpx["rate"], "px_rate", rtol=2e-2, atol=5e-3)
    check(px_["dropout"], rpx["dropout"], "px_dropout", rtol=2e-2, atol=5e-3)
    # protein heads stay full f32
    for k in rpy:
        check(py_[k], rpy[k], f"py_{k}", rtol=1e-2, atol=1e-3)
    check(log_back, rlog, "log_pro_back_mean", rtol=1e-2, atol=1e-3)
    # exact per-row normalization -> rows sum to 1 tightly
    assert bool(jnp.allclose(jnp.sum(px_["scale"], axis=-1), 1.0, atol=1e-4))
    assert bool(jnp.allclose(jnp.sum(py_["scale"], axis=-1), 1.0, atol=1e-4))
    assert bool(jnp.all(jnp.isfinite(log_back)))

    print("KERNEL_OK")
</pallas_src>

<mosaic_0001>
module attributes {stable_mosaic.version = 11 : i64} {
  func.func @_decoder_totalvi_kernel(%arg0: i32, %arg1: i32, %arg2: memref<8x16xf32, #tpu.memory_space<vmem>>, %arg3: memref<8x1xf32, #tpu.memory_space<vmem>>, %arg4: memref<8x32xf32, #tpu.memory_space<vmem>>, %arg5: memref<16x128xf32, #tpu.memory_space<vmem>>, %arg6: memref<1x128xf32, #tpu.memory_space<vmem>>, %arg7: memref<1x128xf32, #tpu.memory_space<vmem>>, %arg8: memref<1x128xf32, #tpu.memory_space<vmem>>, %arg9: memref<48x64xf32, #tpu.memory_space<vmem>>, %arg10: memref<1x64xf32, #tpu.memory_space<vmem>>, %arg11: memref<48x32xf32, #tpu.memory_space<vmem>>, %arg12: memref<1x32xf32, #tpu.memory_space<vmem>>, %arg13: memref<48x32xf32, #tpu.memory_space<vmem>>, %arg14: memref<1x32xf32, #tpu.memory_space<vmem>>, %arg15: memref<48x256xbf16, #tpu.memory_space<vmem>>, %arg16: memref<1x256xf32, #tpu.memory_space<vmem>>, %arg17: memref<48x256xbf16, #tpu.memory_space<vmem>>, %arg18: memref<1x256xf32, #tpu.memory_space<vmem>>, %arg19: memref<8x256xf32, #tpu.memory_space<vmem>>, %arg20: memref<8x256xf32, #tpu.memory_space<vmem>>, %arg21: memref<8x256xf32, #tpu.memory_space<vmem>>, %arg22: memref<8x256xf32, #tpu.memory_space<vmem>>, %arg23: memref<8x48xbf16, #tpu.memory_space<vmem>>, %arg24: memref<8x48xbf16, #tpu.memory_space<vmem>>, %arg25: memref<8x1xf32, #tpu.memory_space<vmem>>, %arg26: memref<8x1xf32, #tpu.memory_space<vmem>>, %arg27: memref<8x256xf32, #tpu.memory_space<vmem>>) attributes {dimension_semantics = [#tpu.dimension_semantics<arbitrary>, #tpu.dimension_semantics<arbitrary>], iteration_bounds = array<i64: 2, 1>, scalar_prefetch = 0 : i64, scratch_operands = 5 : i64, tpu.core_type = #tpu.core_type<tc>, window_params = [{pipeline_mode = #tpu.pipeline_mode<synchronous>, transform_indices = @transform_0, window_bounds = array<i64: 8, 16>}, {pipeline_mode = #tpu.pipeline_mode<synchronous>, transform_indices = @transform_1, window_bounds = array<i64: 8, 1>}, {pipeline_mode = #tpu.pipeline_mode<synchronous>, transform_indices = @transform_2, window_bounds = array<i64: 8, 32>}, {pipeline_mode = #tpu.pipeline_mode<synchronous>, transform_indices = @transform_3, window_bounds = array<i64: 16, 128>}, {pipeline_mode = #tpu.pipeline_mode<synchronous>, transform_indices = @transform_4, window_bounds = array<i64: 1, 128>}, {pipeline_mode = #tpu.pipeline_mode<synchronous>, transform_indices = @transform_5, window_bounds = array<i64: 1, 128>}, {pipeline_mode = #tpu.pipeline_mode<synchronous>, transform_indices = @transform_6, window_bounds = array<i64: 1, 128>}, {pipeline_mode = #tpu.pipeline_mode<synchronous>, transform_indices = @transform_7, window_bounds = array<i64: 48, 64>}, {pipeline_mode = #tpu.pipeline_mode<synchronous>, transform_indices = @transform_8, window_bounds = array<i64: 1, 64>}, {pipeline_mode = #tpu.pipeline_mode<synchronous>, transform_indices = @transform_9, window_bounds = array<i64: 48, 32>}, {pipeline_mode = #tpu.pipeline_mode<synchronous>, transform_indices = @transform_10, window_bounds = array<i64: 1, 32>}, {pipeline_mode = #tpu.pipeline_mode<synchronous>, transform_indices = @transform_11, window_bounds = array<i64: 48, 32>}, {pipeline_mode = #tpu.pipeline_mode<synchronous>, transform_indices = @transform_12, window_bounds = array<i64: 1, 32>}, {transform_indices = @transform_13, window_bounds = array<i64: 48, 256>}, {transform_indices = @transform_14, window_bounds = array<i64: 1, 256>}, {transform_indices = @transform_15, window_bounds = array<i64: 48, 256>}, {transform_indices = @transform_16, window_bounds = array<i64: 1, 256>}, {transform_indices = @transform_17, window_bounds = array<i64: 8, 256>}, {transform_indices = @transform_18, window_bounds = array<i64: 8, 256>}, {transform_indices = @transform_19, window_bounds = array<i64: 8, 256>}, {pipeline_mode = #tpu.pipeline_mode<synchronous>, transform_indices = @transform_20, window_bounds = array<i64: 8, 256>}]} {
    %c0_i32 = arith.constant 0 : i32
    %0 = arith.cmpi eq, %arg0, %c0_i32 : i32
    %c0_i32_0 = arith.constant 0 : i32
    %1 = arith.cmpi eq, %arg1, %c0_i32_0 : i32
    %2 = arith.andi %0, %1 : i1
    %3 = arith.extui %2 : i1 to i32
    %c0_i32_1 = arith.constant 0 : i32
    %4 = arith.cmpi ne, %3, %c0_i32_1 : i32
    scf.if %4 {
      %c0 = arith.constant 0 : index
      %c0_5 = arith.constant 0 : index
      %11 = vector.load %arg2[%c0, %c0_5] : memref<8x16xf32, #tpu.memory_space<vmem>>, vector<8x16xf32>
      %c0_6 = arith.constant 0 : index
      %c0_7 = arith.constant 0 : index
      %12 = vector.load %arg5[%c0_6, %c0_7] : memref<16x128xf32, #tpu.memory_space<vmem>>, vector<16x128xf32>
      %cst = arith.constant dense<0.000000e+00> : vector<8x128xf32>
      %13 = tpu.matmul %11, %12, %cst {dimension_numbers = #tpu.dot_dimension_numbers<[1], [0], [0], [1], [0, 0, 1, 1], [], []>} : vector<8x16xf32>, vector<16x128xf32>, vector<8x128xf32> -> vector<8x128xf32>
      %c0_8 = arith.constant 0 : index
      %c0_9 = arith.constant 0 : index
      %14 = vector.load %arg6[%c0_8, %c0_9] : memref<1x128xf32, #tpu.memory_space<vmem>>, vector<1x128xf32>
      %15 = vector.broadcast %14 : vector<1x128xf32> to vector<8x128xf32>
      %16 = arith.addf %13, %15 : vector<8x128xf32>
      %cst_10 = arith.constant dense<0.000000e+00> : vector<128xf32>
      %17 = vector.multi_reduction <add>, %16, %cst_10 [0] : vector<8x128xf32> to vector<128xf32>
      %18 = vector.shape_cast %17 : vector<128xf32> to vector<1x128xf32>
      %cst_11 = arith.constant 8.000000e+00 : f32
      %19 = vector.broadcast %cst_11 : f32 to vector<1x128xf32>
      %20 = arith.divf %18, %19 : vector<1x128xf32>
      %21 = vector.broadcast %20 : vector<1x128xf32> to vector<8x128xf32>
      %22 = arith.subf %16, %21 : vector<8x128xf32>
      %23 = arith.mulf %22, %22 : vector<8x128xf32>
      %cst_12 = arith.constant dense<0.000000e+00> : vector<128xf32>
      %24 = vector.multi_reduction <add>, %23, %cst_12 [0] : vector<8x128xf32> to vector<128xf32>
      %25 = vector.shape_cast %24 : vector<128xf32> to vector<1x128xf32>
      %cst_13 = arith.constant 8.000000e+00 : f32
      %26 = vector.broadcast %cst_13 : f32 to vector<1x128xf32>
      %27 = arith.divf %25, %26 : vector<1x128xf32>
      %28 = vector.broadcast %20 : vector<1x128xf32> to vector<8x128xf32>
      %29 = arith.subf %16, %28 : vector<8x128xf32>
      %cst_14 = arith.constant 1.000000e-03 : f32
      %30 = vector.broadcast %cst_14 : f32 to vector<1x128xf32>
      %31 = arith.addf %27, %30 : vector<1x128xf32>
      %32 = math.rsqrt %31 : vector<1x128xf32>
      %33 = vector.broadcast %32 : vector<1x128xf32> to vector<8x128xf32>
      %34 = arith.mulf %29, %33 : vector<8x128xf32>
      %c0_15 = arith.constant 0 : index
      %c0_16 = arith.constant 0 : index
      %35 = vector.load %arg7[%c0_15, %c0_16] : memref<1x128xf32, #tpu.memory_space<vmem>>, vector<1x128xf32>
      %36 = vector.broadcast %35 : vector<1x128xf32> to vector<8x128xf32>
      %37 = arith.mulf %34, %36 : vector<8x128xf32>
      %c0_17 = arith.constant 0 : index
      %c0_18 = arith.constant 0 : index
      %38 = vector.load %arg8[%c0_17, %c0_18] : memref<1x128xf32, #tpu.memory_space<vmem>>, vector<1x128xf32>
      %39 = vector.broadcast %38 : vector<1x128xf32> to vector<8x128xf32>
      %40 = arith.addf %37, %39 : vector<8x128xf32>
      %cst_19 = arith.constant 0.000000e+00 : f32
      %41 = vector.broadcast %cst_19 : f32 to vector<8x128xf32>
      %42 = arith.maximumf %40, %41 : vector<8x128xf32>
      %43 = vector.extract_strided_slice %42 {offsets = [0, 0], sizes = [8, 32], strides = [1, 1]} : vector<8x128xf32> to vector<8x32xf32>
      %44 = vector.extract_strided_slice %42 {offsets = [0, 32], sizes = [8, 32], strides = [1, 1]} : vector<8x128xf32> to vector<8x32xf32>
      %45 = vector.extract_strided_slice %42 {offsets = [0, 64], sizes = [8, 32], strides = [1, 1]} : vector<8x128xf32> to vector<8x32xf32>
      %46 = vector.extract_strided_slice %42 {offsets = [0, 96], sizes = [8, 32], strides = [1, 1]} : vector<8x128xf32> to vector<8x32xf32>
      %47 = tpu.concatenate %43, %11 in 1 : vector<8x32xf32>, vector<8x16xf32> -> vector<8x48xf32>
      %48 = arith.truncf %47 : vector<8x48xf32> to vector<8x48xbf16>
      %c0_20 = arith.constant 0 : index
      %c0_21 = arith.constant 0 : index
      %49 = vector.load %arg23[%c0_20, %c0_21] : memref<8x48xbf16, #tpu.memory_space<vmem>>, vector<8x48xbf16>
      tpu.vector_store %arg23[%c0_20, %c0_21], %48 {strides = array<i32>} : memref<8x48xbf16, #tpu.memory_space<vmem>>, vector<8x48xbf16>,
      %50 = tpu.concatenate %46, %11 in 1 : vector<8x32xf32>, vector<8x16xf32> -> vector<8x48xf32>
      %51 = arith.truncf %50 : vector<8x48xf32> to vector<8x48xbf16>
      %c0_22 = arith.constant 0 : index
      %c0_23 = arith.constant 0 : index
      %52 = vector.load %arg24[%c0_22, %c0_23] : memref<8x48xbf16, #tpu.memory_space<vmem>>, vector<8x48xbf16>
      tpu.vector_store %arg24[%c0_22, %c0_23], %51 {strides = array<i32>} : memref<8x48xbf16, #tpu.memory_space<vmem>>, vector<8x48xbf16>,
      %cst_24 = arith.constant 0xFF800000 : f32
      %53 = vector.broadcast %cst_24 : f32 to vector<8x1xf32>
      %c0_25 = arith.constant 0 : index
      %c0_26 = arith.constant 0 : index
      %54 = vector.load %arg25[%c0_25, %c0_26] : memref<8x1xf32, #tpu.memory_space<vmem>>, vector<8x1xf32>
      tpu.vector_store %arg25[%c0_25, %c0_26], %53 {strides = array<i32>} : memref<8x1xf32, #tpu.memory_space<vmem>>, vector<8x1xf32>,
      %cst_27 = arith.constant 0.000000e+00 : f32
      %55 = vector.broadcast %cst_27 : f32 to vector<8x1xf32>
      %c0_28 = arith.constant 0 : index
      %c0_29 = arith.constant 0 : index
      %56 = vector.load %arg26[%c0_28, %c0_29] : memref<8x1xf32, #tpu.memory_space<vmem>>, vector<8x1xf32>
      tpu.vector_store %arg26[%c0_28, %c0_29], %55 {strides = array<i32>} : memref<8x1xf32, #tpu.memory_space<vmem>>, vector<8x1xf32>,
      %57 = tpu.concatenate %44, %11 in 1 : vector<8x32xf32>, vector<8x16xf32> -> vector<8x48xf32>
      %58 = tpu.concatenate %45, %11 in 1 : vector<8x32xf32>, vector<8x16xf32> -> vector<8x48xf32>
      %59 = tpu.concatenate %46, %11 in 1 : vector<8x32xf32>, vector<8x16xf32> -> vector<8x48xf32>
      %c0_30 = arith.constant 0 : index
      %c0_31 = arith.constant 0 : index
      %60 = vector.load %arg9[%c0_30, %c0_31] : memref<48x64xf32, #tpu.memory_space<vmem>>, vector<48x64xf32>
      %cst_32 = arith.constant dense<0.000000e+00> : vector<8x64xf32>
      %61 = tpu.matmul %57, %60, %cst_32 {dimension_numbers = #tpu.dot_dimension_numbers<[1], [0], [0], [1], [0, 0, 1, 1], [], []>} : vector<8x48xf32>, vector<48x64xf32>, vector<8x64xf32> -> vector<8x64xf32>
      %c0_33 = arith.constant 0 : index
      %c0_34 = arith.constant 0 : index
      %62 = vector.load %arg10[%c0_33, %c0_34] : memref<1x64xf32, #tpu.memory_space<vmem>>, vector<1x64xf32>
      %63 = vector.broadcast %62 : vector<1x64xf32> to vector<8x64xf32>
      %64 = arith.addf %61, %63 : vector<8x64xf32>
      %65 = vector.extract_strided_slice %64 {offsets = [0, 0], sizes = [8, 32], strides = [1, 1]} : vector<8x64xf32> to vector<8x32xf32>
      %66 = vector.extract_strided_slice %64 {offsets = [0, 32], sizes = [8, 32], strides = [1, 1]} : vector<8x64xf32> to vector<8x32xf32>
      %67 = math.exp %66 : vector<8x32xf32>
      %c0_35 = arith.constant 0 : index
      %c0_36 = arith.constant 0 : index
      %68 = vector.load %arg4[%c0_35, %c0_36] : memref<8x32xf32, #tpu.memory_space<vmem>>, vector<8x32xf32>
      %69 = arith.mulf %67, %68 : vector<8x32xf32>
      %70 = arith.addf %65, %69 : vector<8x32xf32>
      %71 = math.exp %70 : vector<8x32xf32>
      %c0_37 = arith.constant 0 : index
      %c0_38 = arith.constant 0 : index
      %72 = vector.load %arg11[%c0_37, %c0_38] : memref<48x32xf32, #tpu.memory_space<vmem>>, vector<48x32xf32>
      %cst_39 = arith.constant dense<0.000000e+00> : vector<8x32xf32>
      %73 = tpu.matmul %58, %72, %cst_39 {dimension_numbers = #tpu.dot_dimension_numbers<[1], [0], [0], [1], [0, 0, 1, 1], [], []>} : vector<8x48xf32>, vector<48x32xf32>, vector<8x32xf32> -> vector<8x32xf32>
      %c0_40 = arith.constant 0 : index
      %c0_41 = arith.constant 0 : index
      %74 = vector.load %arg12[%c0_40, %c0_41] : memref<1x32xf32, #tpu.memory_space<vmem>>, vector<1x32xf32>
      %75 = vector.broadcast %74 : vector<1x32xf32> to vector<8x32xf32>
      %76 = arith.addf %73, %75 : vector<8x32xf32>
      %cst_42 = arith.constant 0.000000e+00 : f32
      %77 = vector.broadcast %cst_42 : f32 to vector<8x32xf32>
      %78 = arith.maximumf %76, %77 : vector<8x32xf32>
      %cst_43 = arith.constant 1.000000e+00 : f32
      %79 = vector.broadcast %cst_43 : f32 to vector<8x32xf32>
      %80 = arith.addf %78, %79 : vector<8x32xf32>
      %81 = arith.mulf %71, %80 : vector<8x32xf32>
      %c0_44 = arith.constant 0 : index
      %c0_45 = arith.constant 0 : index
      %82 = vector.load %arg13[%c0_44, %c0_45] : memref<48x32xf32, #tpu.memory_space<vmem>>, vector<48x32xf32>
      %cst_46 = arith.constant dense<0.000000e+00> : vector<8x32xf32>
      %83 = tpu.matmul %59, %82, %cst_46 {dimension_numbers = #tpu.dot_dimension_numbers<[1], [0], [0], [1], [0, 0, 1, 1], [], []>} : vector<8x48xf32>, vector<48x32xf32>, vector<8x32xf32> -> vector<8x32xf32>
      %c0_47 = arith.constant 0 : index
      %c0_48 = arith.constant 0 : index
      %84 = vector.load %arg14[%c0_47, %c0_48] : memref<1x32xf32, #tpu.memory_space<vmem>>, vector<1x32xf32>
      %85 = vector.broadcast %84 : vector<1x32xf32> to vector<8x32xf32>
      %86 = arith.addf %83, %85 : vector<8x32xf32>
      %cst_49 = arith.constant 0.000000e+00 : f32
      %87 = vector.broadcast %cst_49 : f32 to vector<8x32xf32>
      %88 = arith.subf %87, %86 : vector<8x32xf32>
      %cst_50 = arith.constant -6.000000e+01 : f32
      %cst_51 = arith.constant 6.000000e+01 : f32
      %89 = vector.broadcast %cst_50 : f32 to vector<8x32xf32>
      %90 = arith.maximumf %89, %88 : vector<8x32xf32>
      %91 = vector.broadcast %cst_51 : f32 to vector<8x32xf32>
      %92 = arith.minimumf %91, %90 : vector<8x32xf32>
      %93 = math.exp %92 : vector<8x32xf32>
      %cst_52 = arith.constant 1.000000e+00 : f32
      %94 = vector.broadcast %cst_52 : f32 to vector<8x32xf32>
      %95 = arith.addf %94, %93 : vector<8x32xf32>
      %96 = tpu.reciprocal %95 {approx = true} : vector<8x32xf32> -> vector<8x32xf32>
      %cst_53 = arith.constant 1.000000e+00 : f32
      %97 = vector.broadcast %cst_53 : f32 to vector<8x32xf32>
      %98 = arith.subf %97, %96 : vector<8x32xf32>
      %99 = arith.mulf %98, %81 : vector<8x32xf32>
      %100 = math.absf %99 : vector<8x32xf32>
      %cst_54 = arith.constant dense<0.000000e+00> : vector<8xf32>
      %101 = vector.multi_reduction <add>, %100, %cst_54 [1] : vector<8x32xf32> to vector<8xf32>
      %102 = vector.shape_cast %101 : vector<8xf32> to vector<8x1xf32>
      %cst_55 = arith.constant 9.99999996E-13 : f32
      %103 = vector.broadcast %cst_55 : f32 to vector<8x1xf32>
      %104 = arith.maximumf %102, %103 : vector<8x1xf32>
      %cst_56 = arith.constant 1.000000e+00 : f32
      %105 = vector.broadcast %cst_56 : f32 to vector<8x1xf32>
      %106 = arith.divf %105, %104 : vector<8x1xf32>
      %107 = vector.broadcast %106 : vector<8x1xf32> to vector<8x32xf32>
      %108 = arith.mulf %99, %107 : vector<8x32xf32>
      %109 = tpu.concatenate %65, %67, %71, %80, %81, %86, %108, %70 in 1 : vector<8x32xf32>, vector<8x32xf32>, vector<8x32xf32>, vector<8x32xf32>, vector<8x32xf32>, vector<8x32xf32>, vector<8x32xf32>, vector<8x32xf32> -> vector<8x256xf32>
      %c0_57 = arith.constant 0 : index
      %c0_58 = arith.constant 0 : index
      %110 = vector.load %arg22[%c0_57, %c0_58] : memref<8x256xf32, #tpu.memory_space<vmem>>, vector<8x256xf32>
      tpu.vector_store %arg22[%c0_57, %c0_58], %109 {strides = array<i32>} : memref<8x256xf32, #tpu.memory_space<vmem>>, vector<8x256xf32>,
    } else {
    }
    %c0_i32_2 = arith.constant 0 : i32
    %5 = arith.cmpi eq, %arg0, %c0_i32_2 : i32
    %6 = arith.extui %5 : i1 to i32
    %c0_i32_3 = arith.constant 0 : i32
    %7 = arith.cmpi ne, %6, %c0_i32_3 : i32
    scf.if %7 {
      %c0 = arith.constant 0 : index
      %c0_5 = arith.constant 0 : index
      %11 = vector.load %arg23[%c0, %c0_5] : memref<8x48xbf16, #tpu.memory_space<vmem>>, vector<8x48xbf16>
      %c0_6 = arith.constant 0 : index
      %c0_7 = arith.constant 0 : index
      %12 = vector.load %arg15[%c0_6, %c0_7] : memref<48x256xbf16, #tpu.memory_space<vmem>>, vector<48x256xbf16>
      %cst = arith.constant dense<0.000000e+00> : vector<8x256xf32>
      %13 = tpu.matmul %11, %12, %cst {dimension_numbers = #tpu.dot_dimension_numbers<[1], [0], [0], [1], [0, 0, 1, 1], [], []>} : vector<8x48xbf16>, vector<48x256xbf16>, vector<8x256xf32> -> vector<8x256xf32>
      %c0_8 = arith.constant 0 : index
      %c0_9 = arith.constant 0 : index
      %14 = vector.load %arg16[%c0_8, %c0_9] : memref<1x256xf32, #tpu.memory_space<vmem>>, vector<1x256xf32>
      %15 = vector.broadcast %14 : vector<1x256xf32> to vector<8x256xf32>
      %16 = arith.addf %13, %15 : vector<8x256xf32>
      %c256_i32 = arith.constant 256 : i32
      %17 = arith.muli %arg1, %c256_i32 : i32
      %18 = tpu.assume_multiple %17, 128 : i32
      %c0_10 = arith.constant 0 : index
      %19 = arith.index_cast %18 : i32 to index
      %20 = vector.load %arg27[%c0_10, %19] : memref<8x256xf32, #tpu.memory_space<vmem>>, vector<8x256xf32>
      tpu.vector_store %arg27[%c0_10, %19], %16 {strides = array<i32>} : memref<8x256xf32, #tpu.memory_space<vmem>>, vector<8x256xf32>,
      %c0_11 = arith.constant 0 : index
      %c0_12 = arith.constant 0 : index
      %21 = vector.load %arg25[%c0_11, %c0_12] : memref<8x1xf32, #tpu.memory_space<vmem>>, vector<8x1xf32>
      %cst_13 = arith.constant dense<0xFF800000> : vector<8xf32>
      %22 = vector.multi_reduction <maximumf>, %16, %cst_13 [1] : vector<8x256xf32> to vector<8xf32>
      %23 = vector.shape_cast %22 : vector<8xf32> to vector<8x1xf32>
      %24 = arith.maximumf %21, %23 : vector<8x1xf32>
      %c0_14 = arith.constant 0 : index
      %c0_15 = arith.constant 0 : index
      %25 = vector.load %arg26[%c0_14, %c0_15] : memref<8x1xf32, #tpu.memory_space<vmem>>, vector<8x1xf32>
      %26 = arith.subf %21, %24 : vector<8x1xf32>
      %27 = math.exp %26 : vector<8x1xf32>
      %28 = arith.mulf %25, %27 : vector<8x1xf32>
      %29 = vector.broadcast %24 : vector<8x1xf32> to vector<8x256xf32>
      %30 = arith.subf %16, %29 : vector<8x256xf32>
      %31 = math.exp %30 : vector<8x256xf32>
      %cst_16 = arith.constant dense<0.000000e+00> : vector<8xf32>
      %32 = vector.multi_reduction <add>, %31, %cst_16 [1] : vector<8x256xf32> to vector<8xf32>
      %33 = vector.shape_cast %32 : vector<8xf32> to vector<8x1xf32>
      %34 = arith.addf %28, %33 : vector<8x1xf32>
      %c0_17 = arith.constant 0 : index
      %c0_18 = arith.constant 0 : index
      %35 = vector.load %arg26[%c0_17, %c0_18] : memref<8x1xf32, #tpu.memory_space<vmem>>, vector<8x1xf32>
      tpu.vector_store %arg26[%c0_17, %c0_18], %34 {strides = array<i32>} : memref<8x1xf32, #tpu.memory_space<vmem>>, vector<8x1xf32>,
      %c0_19 = arith.constant 0 : index
      %c0_20 = arith.constant 0 : index
      %36 = vector.load %arg25[%c0_19, %c0_20] : memref<8x1xf32, #tpu.memory_space<vmem>>, vector<8x1xf32>
      tpu.vector_store %arg25[%c0_19, %c0_20], %24 {strides = array<i32>} : memref<8x1xf32, #tpu.memory_space<vmem>>, vector<8x1xf32>,
    } else {
    }
    %c1_i32 = arith.constant 1 : i32
    %8 = arith.cmpi eq, %arg0, %c1_i32 : i32
    %9 = arith.extui %8 : i1 to i32
    %c0_i32_4 = arith.constant 0 : i32
    %10 = arith.cmpi ne, %9, %c0_i32_4 : i32
    scf.if %10 {
      %c256_i32 = arith.constant 256 : i32
      %11 = arith.muli %arg1, %c256_i32 : i32
      %12 = tpu.assume_multiple %11, 128 : i32
      %c0 = arith.constant 0 : index
      %13 = arith.index_cast %12 : i32 to index
      %14 = vector.load %arg27[%c0, %13] : memref<8x256xf32, #tpu.memory_space<vmem>>, vector<8x256xf32>
      %c0_5 = arith.constant 0 : index
      %c0_6 = arith.constant 0 : index
      %15 = vector.load %arg26[%c0_5, %c0_6] : memref<8x1xf32, #tpu.memory_space<vmem>>, vector<8x1xf32>
      %cst = arith.constant 1.000000e+00 : f32
      %16 = vector.broadcast %cst : f32 to vector<8x1xf32>
      %17 = arith.divf %16, %15 : vector<8x1xf32>
      %c0_7 = arith.constant 0 : index
      %c0_8 = arith.constant 0 : index
      %18 = vector.load %arg25[%c0_7, %c0_8] : memref<8x1xf32, #tpu.memory_space<vmem>>, vector<8x1xf32>
      %19 = vector.broadcast %18 : vector<8x1xf32> to vector<8x256xf32>
      %20 = arith.subf %14, %19 : vector<8x256xf32>
      %21 = math.exp %20 : vector<8x256xf32>
      %22 = vector.broadcast %17 : vector<8x1xf32> to vector<8x256xf32>
      %23 = arith.mulf %21, %22 : vector<8x256xf32>
      %c0_9 = arith.constant 0 : index
      %c0_10 = arith.constant 0 : index
      %24 = vector.load %arg19[%c0_9, %c0_10] : memref<8x256xf32, #tpu.memory_space<vmem>>, vector<8x256xf32>
      tpu.vector_store %arg19[%c0_9, %c0_10], %23 {strides = array<i32>} : memref<8x256xf32, #tpu.memory_space<vmem>>, vector<8x256xf32>,
      %c0_11 = arith.constant 0 : index
      %c0_12 = arith.constant 0 : index
      %25 = vector.load %arg3[%c0_11, %c0_12] : memref<8x1xf32, #tpu.memory_space<vmem>>, vector<8x1xf32>
      %26 = vector.broadcast %25 : vector<8x1xf32> to vector<8x256xf32>
      %27 = arith.mulf %26, %23 : vector<8x256xf32>
      %c0_13 = arith.constant 0 : index
      %c0_14 = arith.constant 0 : index
      %28 = vector.load %arg20[%c0_13, %c0_14] : memref<8x256xf32, #tpu.memory_space<vmem>>, vector<8x256xf32>
      tpu.vector_store %arg20[%c0_13, %c0_14], %27 {strides = array<i32>} : memref<8x256xf32, #tpu.memory_space<vmem>>, vector<8x256xf32>,
      %c0_15 = arith.constant 0 : index
      %c0_16 = arith.constant 0 : index
      %29 = vector.load %arg24[%c0_15, %c0_16] : memref<8x48xbf16, #tpu.memory_space<vmem>>, vector<8x48xbf16>
      %c0_17 = arith.constant 0 : index
      %c0_18 = arith.constant 0 : index
      %30 = vector.load %arg17[%c0_17, %c0_18] : memref<48x256xbf16, #tpu.memory_space<vmem>>, vector<48x256xbf16>
      %cst_19 = arith.constant dense<0.000000e+00> : vector<8x256xf32>
      %31 = tpu.matmul %29, %30, %cst_19 {dimension_numbers = #tpu.dot_dimension_numbers<[1], [0], [0], [1], [0, 0, 1, 1], [], []>} : vector<8x48xbf16>, vector<48x256xbf16>, vector<8x256xf32> -> vector<8x256xf32>
      %c0_20 = arith.constant 0 : index
      %c0_21 = arith.constant 0 : index
      %32 = vector.load %arg18[%c0_20, %c0_21] : memref<1x256xf32, #tpu.memory_space<vmem>>, vector<1x256xf32>
      %33 = vector.broadcast %32 : vector<1x256xf32> to vector<8x256xf32>
      %34 = arith.addf %31, %33 : vector<8x256xf32>
      %c0_22 = arith.constant 0 : index
      %c0_23 = arith.constant 0 : index
      %35 = vector.load %arg21[%c0_22, %c0_23] : memref<8x256xf32, #tpu.memory_space<vmem>>, vector<8x256xf32>
      tpu.vector_store %arg21[%c0_22, %c0_23], %34 {strides = array<i32>} : memref<8x256xf32, #tpu.memory_space<vmem>>, vector<8x256xf32>,
    } else {
    }
    return
  }
  func.func @transform_0(%arg0: i32, %arg1: i32) -> (i32, i32) {
    %c0_i32 = arith.constant 0 : i32
    %c0_i32_0 = arith.constant 0 : i32
    %c0_i32_1 = arith.constant 0 : i32
    return %c0_i32, %c0_i32_0 : i32, i32
  }
  func.func @transform_1(%arg0: i32, %arg1: i32) -> (i32, i32) {
    %c0_i32 = arith.constant 0 : i32
    %c0_i32_0 = arith.constant 0 : i32
    %c0_i32_1 = arith.constant 0 : i32
    return %c0_i32, %c0_i32_0 : i32, i32
  }
  func.func @transform_2(%arg0: i32, %arg1: i32) -> (i32, i32) {
    %c0_i32 = arith.constant 0 : i32
    %c0_i32_0 = arith.constant 0 : i32
    %c0_i32_1 = arith.constant 0 : i32
    return %c0_i32, %c0_i32_0 : i32, i32
  }
  func.func @transform_3(%arg0: i32, %arg1: i32) -> (i32, i32) {
    %c0_i32 = arith.constant 0 : i32
    %c0_i32_0 = arith.constant 0 : i32
    %c0_i32_1 = arith.constant 0 : i32
    return %c0_i32, %c0_i32_0 : i32, i32
  }
  func.func @transform_4(%arg0: i32, %arg1: i32) -> (i32, i32) {
    %c0_i32 = arith.constant 0 : i32
    %c0_i32_0 = arith.constant 0 : i32
    %c0_i32_1 = arith.constant 0 : i32
    return %c0_i32, %c0_i32_0 : i32, i32
  }
  func.func @transform_5(%arg0: i32, %arg1: i32) -> (i32, i32) {
    %c0_i32 = arith.constant 0 : i32
    %c0_i32_0 = arith.constant 0 : i32
    %c0_i32_1 = arith.constant 0 : i32
    return %c0_i32, %c0_i32_0 : i32, i32
  }
  func.func @transform_6(%arg0: i32, %arg1: i32) -> (i32, i32) {
    %c0_i32 = arith.constant 0 : i32
    %c0_i32_0 = arith.constant 0 : i32
    %c0_i32_1 = arith.constant 0 : i32
    return %c0_i32, %c0_i32_0 : i32, i32
  }
  func.func @transform_7(%arg0: i32, %arg1: i32) -> (i32, i32) {
    %c0_i32 = arith.constant 0 : i32
    %c0_i32_0 = arith.constant 0 : i32
    %c0_i32_1 = arith.constant 0 : i32
    return %c0_i32, %c0_i32_0 : i32, i32
  }
  func.func @transform_8(%arg0: i32, %arg1: i32) -> (i32, i32) {
    %c0_i32 = arith.constant 0 : i32
    %c0_i32_0 = arith.constant 0 : i32
    %c0_i32_1 = arith.constant 0 : i32
    return %c0_i32, %c0_i32_0 : i32, i32
  }
  func.func @transform_9(%arg0: i32, %arg1: i32) -> (i32, i32) {
    %c0_i32 = arith.constant 0 : i32
    %c0_i32_0 = arith.constant 0 : i32
    %c0_i32_1 = arith.constant 0 : i32
    return %c0_i32, %c0_i32_0 : i32, i32
  }
  func.func @transform_10(%arg0: i32, %arg1: i32) -> (i32, i32) {
    %c0_i32 = arith.constant 0 : i32
    %c0_i32_0 = arith.constant 0 : i32
    %c0_i32_1 = arith.constant 0 : i32
    return %c0_i32, %c0_i32_0 : i32, i32
  }
  func.func @transform_11(%arg0: i32, %arg1: i32) -> (i32, i32) {
    %c0_i32 = arith.constant 0 : i32
    %c0_i32_0 = arith.constant 0 : i32
    %c0_i32_1 = arith.constant 0 : i32
    return %c0_i32, %c0_i32_0 : i32, i32
  }
  func.func @transform_12(%arg0: i32, %arg1: i32) -> (i32, i32) {
    %c0_i32 = arith.constant 0 : i32
    %c0_i32_0 = arith.constant 0 : i32
    %c0_i32_1 = arith.constant 0 : i32
    return %c0_i32, %c0_i32_0 : i32, i32
  }
  func.func @transform_13(%arg0: i32, %arg1: i32) -> (i32, i32) {
    %c1_i32 = arith.constant 1 : i32
    %0 = arith.subi %c1_i32, %arg0 : i32
    %1 = arith.muli %arg1, %0 : i32
    %c0_i32 = arith.constant 0 : i32
    %2 = arith.muli %c0_i32, %arg0 : i32
    %3 = arith.addi %1, %2 : i32
    %c0_i32_0 = arith.constant 0 : i32
    %c0_i32_1 = arith.constant 0 : i32
    return %c0_i32_0, %3 : i32, i32
  }
  func.func @transform_14(%arg0: i32, %arg1: i32) -> (i32, i32) {
    %c1_i32 = arith.constant 1 : i32
    %0 = arith.subi %c1_i32, %arg0 : i32
    %1 = arith.muli %arg1, %0 : i32
    %c0_i32 = arith.constant 0 : i32
    %2 = arith.muli %c0_i32, %arg0 : i32
    %3 = arith.addi %1, %2 : i32
    %c0_i32_0 = arith.constant 0 : i32
    %c0_i32_1 = arith.constant 0 : i32
    return %c0_i32_0, %3 : i32, i32
  }
  func.func @transform_15(%arg0: i32, %arg1: i32) -> (i32, i32) {
    %0 = arith.muli %arg1, %arg0 : i32
    %c0_i32 = arith.constant 0 : i32
    %c0_i32_0 = arith.constant 0 : i32
    return %c0_i32, %0 : i32, i32
  }
  func.func @transform_16(%arg0: i32, %arg1: i32) -> (i32, i32) {
    %0 = arith.muli %arg1, %arg0 : i32
    %c0_i32 = arith.constant 0 : i32
    %c0_i32_0 = arith.constant 0 : i32
    return %c0_i32, %0 : i32, i32
  }
  func.func @transform_17(%arg0: i32, %arg1: i32) -> (i32, i32) {
    %0 = arith.muli %arg1, %arg0 : i32
    %c0_i32 = arith.constant 0 : i32
    %c0_i32_0 = arith.constant 0 : i32
    return %c0_i32, %0 : i32, i32
  }
  func.func @transform_18(%arg0: i32, %arg1: i32) -> (i32, i32) {
    %0 = arith.muli %arg1, %arg0 : i32
    %c0_i32 = arith.constant 0 : i32
    %c0_i32_0 = arith.constant 0 : i32
    return %c0_i32, %0 : i32, i32
  }
  func.func @transform_19(%arg0: i32, %arg1: i32) -> (i32, i32) {
    %0 = arith.muli %arg1, %arg0 : i32
    %c0_i32 = arith.constant 0 : i32
    %c0_i32_0 = arith.constant 0 : i32
    return %c0_i32, %0 : i32, i32
  }
  func.func @transform_20(%arg0: i32, %arg1: i32) -> (i32, i32) {
    %c0_i32 = arith.constant 0 : i32
    %c0_i32_0 = arith.constant 0 : i32
    %c0_i32_1 = arith.constant 0 : i32
    return %c0_i32, %c0_i32_0 : i32, i32
  }
}

</mosaic_0001>

<llo_original>
// kernel: tpu_custom_call.1
$region0: #{tpu_custom_call.1}
  #allocation0 [shape = 'u32[]', space=smem, size = 0x4, offset = 0x4, fixed_abs, tag = 'smem constant byte address 0x4 - core index']
  #allocation1 [shape = 'u32[144,128]{1,0:T(1,128)}', space=vmem, size = 0x12000, scoped, tag = 'internal scratch']
  #allocation2 [shape = 'bf16[8,48]{1,0:T(8,128)(2,1)}', space=vmem, size = 0x800, scoped, tag = 'scratch operand']
  #allocation3 [shape = 'bf16[8,48]{1,0:T(8,128)(2,1)}', space=vmem, size = 0x800, scoped, tag = 'scratch operand']
  #allocation4 [shape = 'f32[8,1]{1,0:T(8,128)}', space=vmem, size = 0x1000, scoped, tag = 'scratch operand']
  #allocation5 [shape = 'f32[8,1]{1,0:T(8,128)}', space=vmem, size = 0x1000, scoped, tag = 'scratch operand']
  #allocation6 [shape = 'f32[8,256]{1,0:T(8,128)}', space=vmem, size = 0x2000, scoped, tag = 'scratch operand']
  %s0 = inlined_call_operand.hbm [shape: f32[8,16], index: 0, kind: input, shape index: {}]
  %s1 = inlined_call_operand.vmem [shape: f32[8,1], index: 1, kind: input, shape index: {}]
  %s2 = inlined_call_operand.hbm [shape: f32[8,32], index: 2, kind: input, shape index: {}]
  %s3 = inlined_call_operand.hbm [shape: f32[16,128], index: 3, kind: input, shape index: {}]
  %s4 = inlined_call_operand.hbm [shape: f32[1,128], index: 4, kind: input, shape index: {}]
  %s5 = inlined_call_operand.vmem [shape: f32[1,128], index: 5, kind: input, shape index: {}]
  %s6 = inlined_call_operand.hbm [shape: f32[1,128], index: 6, kind: input, shape index: {}]
  %s7 = inlined_call_operand.vmem [shape: f32[48,64], index: 7, kind: input, shape index: {}]
  %s8 = inlined_call_operand.vmem [shape: f32[1,64], index: 8, kind: input, shape index: {}]
  %s9 = inlined_call_operand.vmem [shape: f32[48,32], index: 9, kind: input, shape index: {}]
  %s10 = inlined_call_operand.vmem [shape: f32[1,32], index: 10, kind: input, shape index: {}]
  %s11 = inlined_call_operand.vmem [shape: f32[48,32], index: 11, kind: input, shape index: {}]
  %s12 = inlined_call_operand.vmem [shape: f32[1,32], index: 12, kind: input, shape index: {}]
  %s13 = inlined_call_operand.vmem [shape: bf16[48,256], index: 13, kind: input, shape index: {}]
  %s14 = inlined_call_operand.vmem [shape: f32[1,256], index: 14, kind: input, shape index: {}]
  %s15 = inlined_call_operand.vmem [shape: bf16[48,256], index: 15, kind: input, shape index: {}]
  %s16 = inlined_call_operand.vmem [shape: f32[1,256], index: 16, kind: input, shape index: {}]
  %s17 = inlined_call_operand.hbm [shape: f32[8,256], index: 17, kind: output, shape index: {0}]
  %s18 = inlined_call_operand.hbm [shape: f32[8,256], index: 18, kind: output, shape index: {1}]
  %s19 = inlined_call_operand.hbm [shape: f32[8,256], index: 19, kind: output, shape index: {2}]
  %s20 = inlined_call_operand.hbm [shape: f32[8,256], index: 20, kind: output, shape index: {3}]
  %21 = xla_tuple %s17, %s18, %s19, %s20
  %s22 = sld [smem:[#allocation0]]
  $region157: #{tpu_custom_call.1} parent=0
    _
  %s24 = ssub.s32 1, %s22
  %s25 = scalar_select 0, %s24, %s22
  $region1: #{tpu_custom_call.1} parent=0
    #allocation7 [shape = 'u8[4096]{0}', space=vmem, size = 0x1000, scoped, tag = 'input window, operand 0, single buffered']
    #allocation8 [shape = 's32[2]{0}', space=sflag, size = 0x8, scoped, tag = 'scoped memory for tpu_custom_call.1']
    #allocation9 [shape = 's32[2]{0}', space=sflag, size = 0x8, scoped, tag = 'scoped memory for tpu_custom_call.1']
    #allocation10 [shape = 'u8[4096]{0}', space=vmem, size = 0x1000, scoped, tag = 'input window, operand 2, single buffered']
    #allocation11 [shape = 's32[1]{0}', space=sflag, size = 0x4, scoped, tag = 'scoped memory for tpu_custom_call.1']
    #allocation12 [shape = 'u8[8192]{0}', space=vmem, size = 0x2000, scoped, tag = 'input window, operand 3, single buffered']
    #allocation13 [shape = 'u8[512]{0}', space=vmem, size = 0x400, scoped, tag = 'input window, operand 4, single buffered']
    #allocation14 [shape = 's32[1]{0}', space=sflag, size = 0x4, scoped, tag = 'scoped memory for tpu_custom_call.1']
    #allocation15 [shape = 'u8[512]{0}', space=vmem, size = 0x400, scoped, tag = 'input window, operand 6, single buffered']
    #allocation16 [shape = 'u8[16384]{0}', space=vmem, size = 0x4000, scoped, tag = 'output window, operand 0']
    #allocation17 [shape = 'u8[16384]{0}', space=vmem, size = 0x4000, scoped, tag = 'output window, operand 1']
    #allocation18 [shape = 's32[2]{0}', space=sflag, size = 0x8, scoped, tag = 'scoped memory for tpu_custom_call.1']
    #allocation19 [shape = 'u8[16384]{0}', space=vmem, size = 0x4000, scoped, tag = 'output window, operand 2']
    #allocation20 [shape = 'u8[8192]{0}', space=vmem, size = 0x2000, scoped, tag = 'output window, operand 3, single buffered']
    #allocation21 [shape = 's32[1]{0}', space=sflag, size = 0x4, scoped, tag = 'scoped memory for tpu_custom_call.1']
    %26 = vsyncpa [#allocation8], 0
    %27 = vsyncpa [#allocation11], 0
    %28 = vsyncpa [#allocation14], 0
    %29 = vsyncpa [#allocation9], 0
    %s30 = scalar_lea.sflag [#allocation9], 1
    %31 = vsyncpa %s30, 0
    %32 = vsyncpa [#allocation18], 0
    %s33 = scalar_lea.sflag [#allocation18], 1
    %34 = vsyncpa %s33, 0
    %35 = vsyncpa [#allocation21], 0
    loop: start=0, step=1, limit=4
    $region2: #{tpu_custom_call.1} parent=1 // loop_pre_header
      _
    $region3: #{tpu_custom_call.1} parent=1 // loop_header
      %s37 = sphi 0, %s41
      %p38 = scmp.ge.s32.totalorder %s37, 4
      %s44 = sphi 0, %s56
      %s45 = sphi 0, %s52
      %s46 = sphi 0, %s44
      %s47 = sphi 0, %s45
      %s48 = sphi 0, %s46
      %s49 = sphi 0, %s47
      %s57 = sphi 0, %s57
      %s59 = sphi 0, %s57
      %s60 = sphi 0, %s59
      %s74 = sphi 0, %s60
      %s78 = sphi 0, %s78
      %s80 = sphi 0, %s78
      %s81 = sphi 0, %s80
      %s95 = sphi 0, %s81
      %s99 = sphi 0, %s99
      %s101 = sphi 0, %s99
      %s102 = sphi 0, %s101
      %s116 = sphi 0, %s102
      %s120 = sphi 0, %s120
      %s122 = sphi 0, %s120
      %s123 = sphi 0, %s122
      %s137 = sphi 0, %s123
      %s141 = sphi 0, %s141
      %s143 = sphi 0, %s141
      %s144 = sphi 0, %s143
      %s158 = sphi 0, %s144
      %s162 = sphi 0, %s162
      %s164 = sphi 0, %s162
      %s165 = sphi 0, %s164
      %s179 = sphi 0, %s165
      %s183 = sphi 0, %s183
      %s185 = sphi 0, %s183
      %s186 = sphi 0, %s185
      %s200 = sphi 0, %s186
      %s204 = sphi 0, %s204
      %s206 = sphi 0, %s204
      %s207 = sphi 0, %s206
      %s221 = sphi 0, %s207
      %s225 = sphi 0, %s225
      %s227 = sphi 0, %s225
      %s228 = sphi 0, %s227
      %s242 = sphi 0, %s228
      %s246 = sphi 0, %s246
      %s248 = sphi 0, %s246
      %s249 = sphi 0, %s248
      %s263 = sphi 0, %s249
      %s267 = sphi 0, %s267
      %s269 = sphi 0, %s267
      %s270 = sphi 0, %s269
      %s284 = sphi 0, %s270
      %s288 = sphi 0, %s288
      %s290 = sphi 0, %s288
      %s291 = sphi 0, %s290
      %s305 = sphi 0, %s291
      %s309 = sphi 0, %s309
      %s311 = sphi 0, %s309
      %s312 = sphi 0, %s311
      %s326 = sphi 0, %s312
      %s336 = sphi 0, %s338
      %s339 = sphi 0, %s336
      %s340 = sphi 0, %s339
      %s356 = sphi 0, %s340
      %s366 = sphi 0, %s368
      %s369 = sphi 0, %s366
      %s370 = sphi 0, %s369
      %s386 = sphi 0, %s370
      %s394 = sphi 0, %s396
      %s397 = sphi 0, %s394
      %s398 = sphi 0, %s397
      %s414 = sphi 0, %s398
      %s422 = sphi 0, %s424
      %s425 = sphi 0, %s422
      %s426 = sphi 0, %s425
      %s442 = sphi 0, %s426
      %s450 = sphi 0, %s452
      %s453 = sphi 0, %s450
      %s454 = sphi 0, %s453
      %s470 = sphi 0, %s454
      %s478 = sphi 0, %s480
      %s481 = sphi 0, %s478
      %s482 = sphi 0, %s481
      %s498 = sphi 0, %s482
      %s506 = sphi 0, %s508
      %s509 = sphi 0, %s506
      %s510 = sphi 0, %s509
      %s526 = sphi 0, %s510
      %s530 = sphi 0, %s530
      %s532 = sphi 0, %s530
      %s533 = sphi 0, %s532
      %s547 = sphi 0, %s533
    $region4: #{tpu_custom_call.1} parent=1 // loop_header_branch
      %40 = sbr.rel (%p38) target = $region8
    $region5: #{tpu_custom_call.1} parent=1 // loop_body
      %s42 = ssub.s32 %s37, 1
      %s43 = ssub.s32 %s37, 2
      %s50 = sadd.s32 1, %s45
      %p51 = scmp.ge.s32.totalorder %s50, 1
      %s52 = scalar_select %p51, 0, %s50
      %s53 = sadd.s32 1, %s44
      %s54 = scalar_select %p51, %s53, %s44
      %p55 = scmp.ge.s32.totalorder %s54, 2
      %s56 = scalar_select %p55, 0, %s54
      %s58 = sadd.s32 %s57, 1
      %p61 = scmp.eq.s32.totalorder %s37, 1
      %p62 = scmp.ne.s32.totalorder %s57, %s59
      %p63 = scmp.eq.s32.totalorder %s37, 0
      %p64 = por %p62, %p63
      %p65 = scmp.ne.s32.totalorder %s57, %s59
      %p66 = scmp.eq.s32.totalorder %s42, 1
      %p67 = por %p65, %p66
      %p68 = scmp.ne.s32.totalorder %s59, %s60
      %p69 = scmp.eq.s32.totalorder %s42, 0
      %p70 = por %p68, %p69
      %p71 = scmp.ne.s32.totalorder %s59, %s60
      %p72 = scmp.eq.s32.totalorder %s43, 1
      %p73 = por %p71, %p72
      %p75 = scmp.ne.s32.totalorder %s60, %s74
      %p76 = scmp.eq.s32.totalorder %s43, 0
      %p77 = por %p75, %p76
      %s79 = sadd.s32 %s78, 1
      %p82 = scmp.eq.s32.totalorder %s37, 1
      %p83 = scmp.ne.s32.totalorder %s78, %s80
      %p84 = scmp.eq.s32.totalorder %s37, 0
      %p85 = por %p83, %p84
      %p86 = scmp.ne.s32.totalorder %s78, %s80
      %p87 = scmp.eq.s32.totalorder %s42, 1
      %p88 = por %p86, %p87
      %p89 = scmp.ne.s32.totalorder %s80, %s81
      %p90 = scmp.eq.s32.totalorder %s42, 0
      %p91 = por %p89, %p90
      %p92 = scmp.ne.s32.totalorder %s80, %s81
      %p93 = scmp.eq.s32.totalorder %s43, 1
      %p94 = por %p92, %p93
      %p96 = scmp.ne.s32.totalorder %s81, %s95
      %p97 = scmp.eq.s32.totalorder %s43, 0
      %p98 = por %p96, %p97
      %s100 = sadd.s32 %s99, 1
      %p103 = scmp.eq.s32.totalorder %s37, 1
      %p104 = scmp.ne.s32.totalorder %s99, %s101
      %p105 = scmp.eq.s32.totalorder %s37, 0
      %p106 = por %p104, %p105
      %p107 = scmp.ne.s32.totalorder %s99, %s101
      %p108 = scmp.eq.s32.totalorder %s42, 1
      %p109 = por %p107, %p108
      %p110 = scmp.ne.s32.totalorder %s101, %s102
      %p111 = scmp.eq.s32.totalorder %s42, 0
      %p112 = por %p110, %p111
      %p113 = scmp.ne.s32.totalorder %s101, %s102
      %p114 = scmp.eq.s32.totalorder %s43, 1
      %p115 = por %p113, %p114
      %p117 = scmp.ne.s32.totalorder %s102, %s116
      %p118 = scmp.eq.s32.totalorder %s43, 0
      %p119 = por %p117, %p118
      %s121 = sadd.s32 %s120, 1
      %p124 = scmp.eq.s32.totalorder %s37, 1
      %p125 = scmp.ne.s32.totalorder %s120, %s122
      %p126 = scmp.eq.s32.totalorder %s37, 0
      %p127 = por %p125, %p126
      %p128 = scmp.ne.s32.totalorder %s120, %s122
      %p129 = scmp.eq.s32.totalorder %s42, 1
      %p130 = por %p128, %p129
      %p131 = scmp.ne.s32.totalorder %s122, %s123
      %p132 = scmp.eq.s32.totalorder %s42, 0
      %p133 = por %p131, %p132
      %p134 = scmp.ne.s32.totalorder %s122, %s123
      %p135 = scmp.eq.s32.totalorder %s43, 1
      %p136 = por %p134, %p135
      %p138 = scmp.ne.s32.totalorder %s123, %s137
      %p139 = scmp.eq.s32.totalorder %s43, 0
      %p140 = por %p138, %p139
      %s142 = sadd.s32 %s141, 1
      %p145 = scmp.eq.s32.totalorder %s37, 1
      %p146 = scmp.ne.s32.totalorder %s141, %s143
      %p147 = scmp.eq.s32.totalorder %s37, 0
      %p148 = por %p146, %p147
      %p149 = scmp.ne.s32.totalorder %s141, %s143
      %p150 = scmp.eq.s32.totalorder %s42, 1
      %p151 = por %p149, %p150
      %p152 = scmp.ne.s32.totalorder %s143, %s144
      %p153 = scmp.eq.s32.totalorder %s42, 0
      %p154 = por %p152, %p153
      %p155 = scmp.ne.s32.totalorder %s143, %s144
      %p156 = scmp.eq.s32.totalorder %s43, 1
      %p157 = por %p155, %p156
      %p159 = scmp.ne.s32.totalorder %s144, %s158
      %p160 = scmp.eq.s32.totalorder %s43, 0
      %p161 = por %p159, %p160
      %s163 = sadd.s32 %s162, 1
      %p166 = scmp.eq.s32.totalorder %s37, 1
      %p167 = scmp.ne.s32.totalorder %s162, %s164
      %p168 = scmp.eq.s32.totalorder %s37, 0
      %p169 = por %p167, %p168
      %p170 = scmp.ne.s32.totalorder %s162, %s164
      %p171 = scmp.eq.s32.totalorder %s42, 1
      %p172 = por %p170, %p171
      %p173 = scmp.ne.s32.totalorder %s164, %s165
      %p174 = scmp.eq.s32.totalorder %s42, 0
      %p175 = por %p173, %p174
      %p176 = scmp.ne.s32.totalorder %s164, %s165
      %p177 = scmp.eq.s32.totalorder %s43, 1
      %p178 = por %p176, %p177
      %p180 = scmp.ne.s32.totalorder %s165, %s179
      %p181 = scmp.eq.s32.totalorder %s43, 0
      %p182 = por %p180, %p181
      %s184 = sadd.s32 %s183, 1
      %p187 = scmp.eq.s32.totalorder %s37, 1
      %p188 = scmp.ne.s32.totalorder %s183, %s185
      %p189 = scmp.eq.s32.totalorder %s37, 0
      %p190 = por %p188, %p189
      %p191 = scmp.ne.s32.totalorder %s183, %s185
      %p192 = scmp.eq.s32.totalorder %s42, 1
      %p193 = por %p191, %p192
      %p194 = scmp.ne.s32.totalorder %s185, %s186
      %p195 = scmp.eq.s32.totalorder %s42, 0
      %p196 = por %p194, %p195
      %p197 = scmp.ne.s32.totalorder %s185, %s186
      %p198 = scmp.eq.s32.totalorder %s43, 1
      %p199 = por %p197, %p198
      %p201 = scmp.ne.s32.totalorder %s186, %s200
      %p202 = scmp.eq.s32.totalorder %s43, 0
      %p203 = por %p201, %p202
      %s205 = sadd.s32 %s204, 1
      %p208 = scmp.eq.s32.totalorder %s37, 1
      %p209 = scmp.ne.s32.totalorder %s204, %s206
      %p210 = scmp.eq.s32.totalorder %s37, 0
      %p211 = por %p209, %p210
      %p212 = scmp.ne.s32.totalorder %s204, %s206
      %p213 = scmp.eq.s32.totalorder %s42, 1
      %p214 = por %p212, %p213
      %p215 = scmp.ne.s32.totalorder %s206, %s207
      %p216 = scmp.eq.s32.totalorder %s42, 0
      %p217 = por %p215, %p216
      %p218 = scmp.ne.s32.totalorder %s206, %s207
      %p219 = scmp.eq.s32.totalorder %s43, 1
      %p220 = por %p218, %p219
      %p222 = scmp.ne.s32.totalorder %s207, %s221
      %p223 = scmp.eq.s32.totalorder %s43, 0
      %p224 = por %p222, %p223
      %s226 = sadd.s32 %s225, 1
      %p229 = scmp.eq.s32.totalorder %s37, 1
      %p230 = scmp.ne.s32.totalorder %s225, %s227
      %p231 = scmp.eq.s32.totalorder %s37, 0
      %p232 = por %p230, %p231
      %p233 = scmp.ne.s32.totalorder %s225, %s227
      %p234 = scmp.eq.s32.totalorder %s42, 1
      %p235 = por %p233, %p234
      %p236 = scmp.ne.s32.totalorder %s227, %s228
      %p237 = scmp.eq.s32.totalorder %s42, 0
      %p238 = por %p236, %p237
      %p239 = scmp.ne.s32.totalorder %s227, %s228
      %p240 = scmp.eq.s32.totalorder %s43, 1
      %p241 = por %p239, %p240
      %p243 = scmp.ne.s32.totalorder %s228, %s242
      %p244 = scmp.eq.s32.totalorder %s43, 0
      %p245 = por %p243, %p244
      %s247 = sadd.s32 %s246, 1
      %p250 = scmp.eq.s32.totalorder %s37, 1
      %p251 = scmp.ne.s32.totalorder %s246, %s248
      %p252 = scmp.eq.s32.totalorder %s37, 0
      %p253 = por %p251, %p252
      %p254 = scmp.ne.s32.totalorder %s246, %s248
      %p255 = scmp.eq.s32.totalorder %s42, 1
      %p256 = por %p254, %p255
      %p257 = scmp.ne.s32.totalorder %s248, %s249
      %p258 = scmp.eq.s32.totalorder %s42, 0
      %p259 = por %p257, %p258
      %p260 = scmp.ne.s32.totalorder %s248, %s249
      %p261 = scmp.eq.s32.totalorder %s43, 1
      %p262 = por %p260, %p261
      %p264 = scmp.ne.s32.totalorder %s249, %s263
      %p265 = scmp.eq.s32.totalorder %s43, 0
      %p266 = por %p264, %p265
      %s268 = sadd.s32 %s267, 1
      %p271 = scmp.eq.s32.totalorder %s37, 1
      %p272 = scmp.ne.s32.totalorder %s267, %s269
      %p273 = scmp.eq.s32.totalorder %s37, 0
      %p274 = por %p272, %p273
      %p275 = scmp.ne.s32.totalorder %s267, %s269
      %p276 = scmp.eq.s32.totalorder %s42, 1
      %p277 = por %p275, %p276
      %p278 = scmp.ne.s32.totalorder %s269, %s270
      %p279 = scmp.eq.s32.totalorder %s42, 0
      %p280 = por %p278, %p279
      %p281 = scmp.ne.s32.totalorder %s269, %s270
      %p282 = scmp.eq.s32.totalorder %s43, 1
      %p283 = por %p281, %p282
      %p285 = scmp.ne.s32.totalorder %s270, %s284
      %p286 = scmp.eq.s32.totalorder %s43, 0
      %p287 = por %p285, %p286
      %s289 = sadd.s32 %s288, 1
      %p292 = scmp.eq.s32.totalorder %s37, 1
      %p293 = scmp.ne.s32.totalorder %s288, %s290
      %p294 = scmp.eq.s32.totalorder %s37, 0
      %p295 = por %p293, %p294
      %p296 = scmp.ne.s32.totalorder %s288, %s290
      %p297 = scmp.eq.s32.totalorder %s42, 1
      %p298 = por %p296, %p297
      %p299 = scmp.ne.s32.totalorder %s290, %s291
      %p300 = scmp.eq.s32.totalorder %s42, 0
      %p301 = por %p299, %p300
      %p302 = scmp.ne.s32.totalorder %s290, %s291
      %p303 = scmp.eq.s32.totalorder %s43, 1
      %p304 = por %p302, %p303
      %p306 = scmp.ne.s32.totalorder %s291, %s305
      %p307 = scmp.eq.s32.totalorder %s43, 0
      %p308 = por %p306, %p307
      %s310 = sadd.s32 %s309, 1
      %p313 = scmp.eq.s32.totalorder %s37, 1
      %p314 = scmp.ne.s32.totalorder %s309, %s311
      %p315 = scmp.eq.s32.totalorder %s37, 0
      %p316 = por %p314, %p315
      %p317 = scmp.ne.s32.totalorder %s309, %s311
      %p318 = scmp.eq.s32.totalorder %s42, 1
      %p319 = por %p317, %p318
      %p320 = scmp.ne.s32.totalorder %s311, %s312
      %p321 = scmp.eq.s32.totalorder %s42, 0
      %p322 = por %p320, %p321
      %p323 = scmp.ne.s32.totalorder %s311, %s312
      %p324 = scmp.eq.s32.totalorder %s43, 1
      %p325 = por %p323, %p324
      %p327 = scmp.ne.s32.totalorder %s312, %s326
      %p328 = scmp.eq.s32.totalorder %s43, 0
      %p329 = por %p327, %p328
      %s330 = ssub.s32 1, %s44
      %s331 = smul.u32 %s45, %s330
      %s332 = ssub.s32 1, %s56
      %s333 = smul.u32 %s52, %s332
      %s334 = ssub.s32 %s331, %s333
      %p335 = scmp.eq.s32.totalorder %s334, 0
      %s337 = sadd.s32 %s336, 1
      %s338 = scalar_select %p335, %s336, %s337
      %p341 = pneg %p335
      %p342 = scmp.eq.s32.totalorder %s37, 1
      %p343 = por %p341, %p342
      %p344 = scmp.ne.s32.totalorder %s336, %s339
      %p345 = scmp.eq.s32.totalorder %s37, 0
      %p346 = por %p344, %p345
      %p347 = scmp.ne.s32.totalorder %s336, %s339
      %p348 = scmp.eq.s32.totalorder %s42, 1
      %p349 = por %p347, %p348
      %p350 = scmp.ne.s32.totalorder %s339, %s340
      %p351 = scmp.eq.s32.totalorder %s42, 0
      %p352 = por %p350, %p351
      %p353 = scmp.ne.s32.totalorder %s339, %s340
      %p354 = scmp.eq.s32.totalorder %s43, 1
      %p355 = por %p353, %p354
      %p357 = scmp.ne.s32.totalorder %s340, %s356
      %p358 = scmp.eq.s32.totalorder %s43, 0
      %p359 = por %p357, %p358
      %s360 = ssub.s32 1, %s44
      %s361 = smul.u32 %s45, %s360
      %s362 = ssub.s32 1, %s56
      %s363 = smul.u32 %s52, %s362
      %s364 = ssub.s32 %s361, %s363
      %p365 = scmp.eq.s32.totalorder %s364, 0
      %s367 = sadd.s32 %s366, 1
      %s368 = scalar_select %p365, %s366, %s367
      %p371 = pneg %p365
      %p372 = scmp.eq.s32.totalorder %s37, 1
      %p373 = por %p371, %p372
      %p374 = scmp.ne.s32.totalorder %s366, %s369
      %p375 = scmp.eq.s32.totalorder %s37, 0
      %p376 = por %p374, %p375
      %p377 = scmp.ne.s32.totalorder %s366, %s369
      %p378 = scmp.eq.s32.totalorder %s42, 1
      %p379 = por %p377, %p378
      %p380 = scmp.ne.s32.totalorder %s369, %s370
      %p381 = scmp.eq.s32.totalorder %s42, 0
      %p382 = por %p380, %p381
      %p383 = scmp.ne.s32.totalorder %s369, %s370
      %p384 = scmp.eq.s32.totalorder %s43, 1
      %p385 = por %p383, %p384
      %p387 = scmp.ne.s32.totalorder %s370, %s386
      %p388 = scmp.eq.s32.totalorder %s43, 0
      %p389 = por %p387, %p388
      %s390 = smul.u32 %s45, %s44
      %s391 = smul.u32 %s52, %s56
      %s392 = ssub.s32 %s390, %s391
      %p393 = scmp.eq.s32.totalorder %s392, 0
      %s395 = sadd.s32 %s394, 1
      %s396 = scalar_select %p393, %s394, %s395
      %p399 = pneg %p393
      %p400 = scmp.eq.s32.totalorder %s37, 1
      %p401 = por %p399, %p400
      %p402 = scmp.ne.s32.totalorder %s394, %s397
      %p403 = scmp.eq.s32.totalorder %s37, 0
      %p404 = por %p402, %p403
      %p405 = scmp.ne.s32.totalorder %s394, %s397
      %p406 = scmp.eq.s32.totalorder %s42, 1
      %p407 = por %p405, %p406
      %p408 = scmp.ne.s32.totalorder %s397, %s398
      %p409 = scmp.eq.s32.totalorder %s42, 0
      %p410 = por %p408, %p409
      %p411 = scmp.ne.s32.totalorder %s397, %s398
      %p412 = scmp.eq.s32.totalorder %s43, 1
      %p413 = por %p411, %p412
      %p415 = scmp.ne.s32.totalorder %s398, %s414
      %p416 = scmp.eq.s32.totalorder %s43, 0
      %p417 = por %p415, %p416
      %s418 = smul.u32 %s45, %s44
      %s419 = smul.u32 %s52, %s56
      %s420 = ssub.s32 %s418, %s419
      %p421 = scmp.eq.s32.totalorder %s420, 0
      %s423 = sadd.s32 %s422, 1
      %s424 = scalar_select %p421, %s422, %s423
      %p427 = pneg %p421
      %p428 = scmp.eq.s32.totalorder %s37, 1
      %p429 = por %p427, %p428
      %p430 = scmp.ne.s32.totalorder %s422, %s425
      %p431 = scmp.eq.s32.totalorder %s37, 0
      %p432 = por %p430, %p431
      %p433 = scmp.ne.s32.totalorder %s422, %s425
      %p434 = scmp.eq.s32.totalorder %s42, 1
      %p435 = por %p433, %p434
      %p436 = scmp.ne.s32.totalorder %s425, %s426
      %p437 = scmp.eq.s32.totalorder %s42, 0
      %p438 = por %p436, %p437
      %p439 = scmp.ne.s32.totalorder %s425, %s426
      %p440 = scmp.eq.s32.totalorder %s43, 1
      %p441 = por %p439, %p440
      %p443 = scmp.ne.s32.totalorder %s426, %s442
      %p444 = scmp.eq.s32.totalorder %s43, 0
      %p445 = por %p443, %p444
      %s446 = smul.u32 %s45, %s44
      %s447 = smul.u32 %s52, %s56
      %s448 = ssub.s32 %s446, %s447
      %p449 = scmp.eq.s32.totalorder %s448, 0
      %s451 = sadd.s32 %s450, 1
      %s452 = scalar_select %p449, %s450, %s451
      %p455 = pneg %p449
      %p456 = scmp.eq.s32.totalorder %s37, 1
      %p457 = por %p455, %p456
      %p458 = scmp.ne.s32.totalorder %s450, %s453
      %p459 = scmp.eq.s32.totalorder %s37, 0
      %p460 = por %p458, %p459
      %p461 = scmp.ne.s32.totalorder %s450, %s453
      %p462 = scmp.eq.s32.totalorder %s42, 1
      %p463 = por %p461, %p462
      %p464 = scmp.ne.s32.totalorder %s453, %s454
      %p465 = scmp.eq.s32.totalorder %s42, 0
      %p466 = por %p464, %p465
      %p467 = scmp.ne.s32.totalorder %s453, %s454
      %p468 = scmp.eq.s32.totalorder %s43, 1
      %p469 = por %p467, %p468
      %p471 = scmp.ne.s32.totalorder %s454, %s470
      %p472 = scmp.eq.s32.totalorder %s43, 0
      %p473 = por %p471, %p472
      %s474 = smul.u32 %s45, %s44
      %s475 = smul.u32 %s52, %s56
      %s476 = ssub.s32 %s474, %s475
      %p477 = scmp.eq.s32.totalorder %s476, 0
      %s479 = sadd.s32 %s478, 1
      %s480 = scalar_select %p477, %s478, %s479
      %p483 = pneg %p477
      %p484 = scmp.eq.s32.totalorder %s37, 1
      %p485 = por %p483, %p484
      %p486 = scmp.ne.s32.totalorder %s478, %s481
      %p487 = scmp.eq.s32.totalorder %s37, 0
      %p488 = por %p486, %p487
      %p489 = scmp.ne.s32.totalorder %s478, %s481
      %p490 = scmp.eq.s32.totalorder %s42, 1
      %p491 = por %p489, %p490
      %p492 = scmp.ne.s32.totalorder %s481, %s482
      %p493 = scmp.eq.s32.totalorder %s42, 0
      %p494 = por %p492, %p493
      %p495 = scmp.ne.s32.totalorder %s481, %s482
      %p496 = scmp.eq.s32.totalorder %s43, 1
      %p497 = por %p495, %p496
      %p499 = scmp.ne.s32.totalorder %s482, %s498
      %p500 = scmp.eq.s32.totalorder %s43, 0
      %p501 = por %p499, %p500
      %s502 = smul.u32 %s45, %s44
      %s503 = smul.u32 %s52, %s56
      %s504 = ssub.s32 %s502, %s503
      %p505 = scmp.eq.s32.totalorder %s504, 0
      %s507 = sadd.s32 %s506, 1
      %s508 = scalar_select %p505, %s506, %s507
      %p511 = pneg %p505
      %p512 = scmp.eq.s32.totalorder %s37, 1
      %p513 = por %p511, %p512
      %p514 = scmp.ne.s32.totalorder %s506, %s509
      %p515 = scmp.eq.s32.totalorder %s37, 0
      %p516 = por %p514, %p515
      %p517 = scmp.ne.s32.totalorder %s506, %s509
      %p518 = scmp.eq.s32.totalorder %s42, 1
      %p519 = por %p517, %p518
      %p520 = scmp.ne.s32.totalorder %s509, %s510
      %p521 = scmp.eq.s32.totalorder %s42, 0
      %p522 = por %p520, %p521
      %p523 = scmp.ne.s32.totalorder %s509, %s510
      %p524 = scmp.eq.s32.totalorder %s43, 1
      %p525 = por %p523, %p524
      %p527 = scmp.ne.s32.totalorder %s510, %s526
      %p528 = scmp.eq.s32.totalorder %s43, 0
      %p529 = por %p527, %p528
      %s531 = sadd.s32 %s530, 1
      %p534 = scmp.eq.s32.totalorder %s37, 1
      %p535 = scmp.ne.s32.totalorder %s530, %s532
      %p536 = scmp.eq.s32.totalorder %s37, 0
      %p537 = por %p535, %p536
      %p538 = scmp.ne.s32.totalorder %s530, %s532
      %p539 = scmp.eq.s32.totalorder %s42, 1
      %p540 = por %p538, %p539
      %p541 = scmp.ne.s32.totalorder %s532, %s533
      %p542 = scmp.eq.s32.totalorder %s42, 0
      %p543 = por %p541, %p542
      %p544 = scmp.ne.s32.totalorder %s532, %s533
      %p545 = scmp.eq.s32.totalorder %s43, 1
      %p546 = por %p544, %p545
      %p548 = scmp.ne.s32.totalorder %s533, %s547
      %p549 = scmp.eq.s32.totalorder %s43, 0
      %p550 = por %p548, %p549
      %p551 = scmp.le.s32.totalorder 1, %s37
      %p552 = scmp.lt.s32.totalorder %s37, 3
      %p553 = pnand %p551, %p552
      %p554 = pneg %p553
      // Predicated region
      $region9: #{tpu_custom_call.1} parent=5 // pred_check
        _
      $region10: #{tpu_custom_call.1} parent=5 // pred_check_branch
        %556 = sbr.rel (%p553) target = $region12
      $region11: #{tpu_custom_call.1} parent=5 // pred_region
        %s557 = ssub.s32 %s37, 1
        // Predicated region
        $region13: #{tpu_custom_call.1} parent=11 // pred_check
          %p558 = pneg %p70
        $region14: #{tpu_custom_call.1} parent=11 // pred_check_branch
          %560 = sbr.rel (%p558) target = $region16
        $region15: #{tpu_custom_call.1} parent=11 // pred_region
          %s562 = ssub.s32 128, 128
          %563 = vsyncadd [#allocation8], %s562
          %s565 = sshll.u32 [#allocation7], 4
          %s566 = int_to_ptr.vmem [resolvable:$true] %s565
          %568 = dma.hbm_to_vmem [thread:$0]  %s0, 128, %s566, [#allocation8]
        $region16: #{tpu_custom_call.1} parent=11 // pred_fallthru
          _
        // Predicated region
        $region17: #{tpu_custom_call.1} parent=11 // pred_check
          %p569 = pneg %p91
        $region18: #{tpu_custom_call.1} parent=11 // pred_check_branch
          %571 = sbr.rel (%p569) target = $region20
        $region19: #{tpu_custom_call.1} parent=11 // pred_region
          _
        $region20: #{tpu_custom_call.1} parent=11 // pred_fallthru
          _
        // Predicated region
        $region21: #{tpu_custom_call.1} parent=11 // pred_check
          %p572 = pneg %p112
        $region22: #{tpu_custom_call.1} parent=11 // pred_check_branch
          %574 = sbr.rel (%p572) target = $region24
        $region23: #{tpu_custom_call.1} parent=11 // pred_region
          %s576 = ssub.s32 128, 128
          %577 = vsyncadd [#allocation11], %s576
          %s579 = sshll.u32 [#allocation10], 4
          %s580 = int_to_ptr.vmem [resolvable:$true] %s579
          %582 = dma.hbm_to_vmem [thread:$0]  %s2, 128, %s580, [#allocation11]
        $region24: #{tpu_custom_call.1} parent=11 // pred_fallthru
          _
        // Predicated region
        $region25: #{tpu_custom_call.1} parent=11 // pred_check
          %p583 = pneg %p133
        $region26: #{tpu_custom_call.1} parent=11 // pred_check_branch
          %585 = sbr.rel (%p583) target = $region28
        $region27: #{tpu_custom_call.1} parent=11 // pred_region
          %s587 = ssub.s32 256, 256
          %588 = vsyncadd [#allocation11], %s587
          %s589 = sshll.u32 [#allocation12], 4
          %s590 = int_to_ptr.vmem [resolvable:$true] %s589
          %595 = dma.hbm_to_vmem [thread:$0]  %s3, 256, %s590, [#allocation11], 128, 128, 8
        $region28: #{tpu_custom_call.1} parent=11 // pred_fallthru
          _
        // Predicated region
        $region29: #{tpu_custom_call.1} parent=11 // pred_check
          %p596 = pneg %p154
        $region30: #{tpu_custom_call.1} parent=11 // pred_check_branch
          %598 = sbr.rel (%p596) target = $region32
        $region31: #{tpu_custom_call.1} parent=11 // pred_region
          %s600 = ssub.s32 16, 16
          %601 = vsyncadd [#allocation14], %s600
          %s603 = sshll.u32 [#allocation13], 4
          %s604 = int_to_ptr.vmem [resolvable:$true] %s603
          %606 = dma.hbm_to_vmem [thread:$0]  %s4, 16, %s604, [#allocation14]
        $region32: #{tpu_custom_call.1} parent=11 // pred_fallthru
          _
        // Predicated region
        $region33: #{tpu_custom_call.1} parent=11 // pred_check
          %p607 = pneg %p175
        $region34: #{tpu_custom_call.1} parent=11 // pred_check_branch
          %609 = sbr.rel (%p607) target = $region36
        $region35: #{tpu_custom_call.1} parent=11 // pred_region
          _
        $region36: #{tpu_custom_call.1} parent=11 // pred_fallthru
          _
        // Predicated region
        $region37: #{tpu_custom_call.1} parent=11 // pred_check
          %p610 = pneg %p196
        $region38: #{tpu_custom_call.1} parent=11 // pred_check_branch
          %612 = sbr.rel (%p610) target = $region40
        $region39: #{tpu_custom_call.1} parent=11 // pred_region
          %s614 = ssub.s32 16, 16
          %615 = vsyncadd [#allocation14], %s614
          %s617 = sshll.u32 [#allocation15], 4
          %s618 = int_to_ptr.vmem [resolvable:$true] %s617
          %620 = dma.hbm_to_vmem [thread:$0]  %s6, 16, %s618, [#allocation14]
        $region40: #{tpu_custom_call.1} parent=11 // pred_fallthru
          _
        // Predicated region
        $region41: #{tpu_custom_call.1} parent=11 // pred_check
          %p621 = pneg %p217
        $region42: #{tpu_custom_call.1} parent=11 // pred_check_branch
          %623 = sbr.rel (%p621) target = $region44
        $region43: #{tpu_custom_call.1} parent=11 // pred_region
          _
        $region44: #{tpu_custom_call.1} parent=11 // pred_fallthru
          _
        // Predicated region
        $region45: #{tpu_custom_call.1} parent=11 // pred_check
          %p624 = pneg %p238
        $region46: #{tpu_custom_call.1} parent=11 // pred_check_branch
          %626 = sbr.rel (%p624) target = $region48
        $region47: #{tpu_custom_call.1} parent=11 // pred_region
          _
        $region48: #{tpu_custom_call.1} parent=11 // pred_fallthru
          _
        // Predicated region
        $region49: #{tpu_custom_call.1} parent=11 // pred_check
          %p627 = pneg %p259
        $region50: #{tpu_custom_call.1} parent=11 // pred_check_branch
          %629 = sbr.rel (%p627) target = $region52
        $region51: #{tpu_custom_call.1} parent=11 // pred_region
          _
        $region52: #{tpu_custom_call.1} parent=11 // pred_fallthru
          _
        // Predicated region
        $region53: #{tpu_custom_call.1} parent=11 // pred_check
          %p630 = pneg %p280
        $region54: #{tpu_custom_call.1} parent=11 // pred_check_branch
          %632 = sbr.rel (%p630) target = $region56
        $region55: #{tpu_custom_call.1} parent=11 // pred_region
          _
        $region56: #{tpu_custom_call.1} parent=11 // pred_fallthru
          _
        // Predicated region
        $region57: #{tpu_custom_call.1} parent=11 // pred_check
          %p633 = pneg %p301
        $region58: #{tpu_custom_call.1} parent=11 // pred_check_branch
          %635 = sbr.rel (%p633) target = $region60
        $region59: #{tpu_custom_call.1} parent=11 // pred_region
          _
        $region60: #{tpu_custom_call.1} parent=11 // pred_fallthru
          _
        // Predicated region
        $region61: #{tpu_custom_call.1} parent=11 // pred_check
          %p636 = pneg %p322
        $region62: #{tpu_custom_call.1} parent=11 // pred_check_branch
          %638 = sbr.rel (%p636) target = $region64
        $region63: #{tpu_custom_call.1} parent=11 // pred_region
          _
        $region64: #{tpu_custom_call.1} parent=11 // pred_fallthru
          _
      $region12: #{tpu_custom_call.1} parent=5 // pred_fallthru
        _
      %p639 = scmp.lt.s32.totalorder %s37, 2
      // Predicated region
      $region65: #{tpu_custom_call.1} parent=5 // pred_check
        %p640 = pneg %p639
      $region66: #{tpu_custom_call.1} parent=5 // pred_check_branch
        %642 = sbr.rel (%p640) target = $region68
      $region67: #{tpu_custom_call.1} parent=5 // pred_region
        // Predicated region
        $region69: #{tpu_custom_call.1} parent=67 // pred_check
          %p643 = pneg %p346
        $region70: #{tpu_custom_call.1} parent=67 // pred_check_branch
          %645 = sbr.rel (%p643) target = $region72
        $region71: #{tpu_custom_call.1} parent=67 // pred_region
          %s646 = ssub.s32 1, %s44
          %s647 = smul.u32 %s45, %s646
          %s648 = smul.u32 2, %s647
          %p649 = scmp.lt.s32.totalorder %s648, 1
          %s650 = scalar_select %p649, %s648, 1
          %s651 = smul.addr %s650, 4
          %s652 = scalar_lea.vmem %s13, %s651
          %s653 = ssub.s32 1, %s44
          %s654 = smul.u32 %s45, %s653
          %s655 = smul.u32 2, %s654
        $region72: #{tpu_custom_call.1} parent=67 // pred_fallthru
          _
        // Predicated region
        $region73: #{tpu_custom_call.1} parent=67 // pred_check
          %p656 = pneg %p376
        $region74: #{tpu_custom_call.1} parent=67 // pred_check_branch
          %658 = sbr.rel (%p656) target = $region76
        $region75: #{tpu_custom_call.1} parent=67 // pred_region
          %s659 = ssub.s32 1, %s44
          %s660 = smul.u32 %s45, %s659
          %s661 = smul.u32 2, %s660
          %p662 = scmp.lt.s32.totalorder %s661, 1
          %s663 = scalar_select %p662, %s661, 1
          %s664 = scalar_lea.vmem %s14, %s663
          %s665 = ssub.s32 1, %s44
          %s666 = smul.u32 %s45, %s665
          %s667 = smul.u32 2, %s666
        $region76: #{tpu_custom_call.1} parent=67 // pred_fallthru
          _
        // Predicated region
        $region77: #{tpu_custom_call.1} parent=67 // pred_check
          %p668 = pneg %p404
        $region78: #{tpu_custom_call.1} parent=67 // pred_check_branch
          %670 = sbr.rel (%p668) target = $region80
        $region79: #{tpu_custom_call.1} parent=67 // pred_region
          %s671 = smul.u32 %s45, %s44
          %s672 = smul.u32 2, %s671
          %p673 = scmp.lt.s32.totalorder %s672, 1
          %s674 = scalar_select %p673, %s672, 1
          %s675 = smul.addr %s674, 4
          %s676 = scalar_lea.vmem %s15, %s675
          %s677 = smul.u32 %s45, %s44
          %s678 = smul.u32 2, %s677
        $region80: #{tpu_custom_call.1} parent=67 // pred_fallthru
          _
        // Predicated region
        $region81: #{tpu_custom_call.1} parent=67 // pred_check
          %p679 = pneg %p432
        $region82: #{tpu_custom_call.1} parent=67 // pred_check_branch
          %681 = sbr.rel (%p679) target = $region84
        $region83: #{tpu_custom_call.1} parent=67 // pred_region
          %s682 = smul.u32 %s45, %s44
          %s683 = smul.u32 2, %s682
          %p684 = scmp.lt.s32.totalorder %s683, 1
          %s685 = scalar_select %p684, %s683, 1
          %s686 = scalar_lea.vmem %s16, %s685
          %s687 = smul.u32 %s45, %s44
          %s688 = smul.u32 2, %s687
        $region84: #{tpu_custom_call.1} parent=67 // pred_fallthru
          _
      $region68: #{tpu_custom_call.1} parent=5 // pred_fallthru
        _
      %p689 = scmp.le.s32.totalorder 1, %s37
      %p690 = scmp.lt.s32.totalorder %s37, 3
      %p691 = pnand %p689, %p690
      %p692 = pneg %p691
      // Predicated region
      $region85: #{tpu_custom_call.1} parent=5 // pred_check
        _
      $region86: #{tpu_custom_call.1} parent=5 // pred_check_branch
        %694 = sbr.rel (%p691) target = $region88
      $region87: #{tpu_custom_call.1} parent=5 // pred_region
        %s695 = ssub.s32 %s37, 1
        // Predicated region
        $region89: #{tpu_custom_call.1} parent=87 // pred_check
          %p696 = pneg %p70
        $region90: #{tpu_custom_call.1} parent=87 // pred_check_branch
          %698 = sbr.rel (%p696) target = $region92
        $region91: #{tpu_custom_call.1} parent=87 // pred_region
          %699 = dma.done [#allocation8], 128
        $region92: #{tpu_custom_call.1} parent=87 // pred_fallthru
          _
        // Predicated region
        $region93: #{tpu_custom_call.1} parent=87 // pred_check
          %p700 = pneg %p112
        $region94: #{tpu_custom_call.1} parent=87 // pred_check_branch
          %702 = sbr.rel (%p700) target = $region96
        $region95: #{tpu_custom_call.1} parent=87 // pred_region
          %703 = dma.done [#allocation11], 128
        $region96: #{tpu_custom_call.1} parent=87 // pred_fallthru
          _
        // Predicated region
        $region97: #{tpu_custom_call.1} parent=87 // pred_check
          %p704 = pneg %p133
        $region98: #{tpu_custom_call.1} parent=87 // pred_check_branch
          %706 = sbr.rel (%p704) target = $region100
        $region99: #{tpu_custom_call.1} parent=87 // pred_region
          %707 = dma.done [#allocation11], 256
        $region100: #{tpu_custom_call.1} parent=87 // pred_fallthru
          _
        // Predicated region
        $region101: #{tpu_custom_call.1} parent=87 // pred_check
          %p708 = pneg %p154
        $region102: #{tpu_custom_call.1} parent=87 // pred_check_branch
          %710 = sbr.rel (%p708) target = $region104
        $region103: #{tpu_custom_call.1} parent=87 // pred_region
          %711 = dma.done [#allocation14], 16
        $region104: #{tpu_custom_call.1} parent=87 // pred_fallthru
          _
        // Predicated region
        $region105: #{tpu_custom_call.1} parent=87 // pred_check
          %p712 = pneg %p196
        $region106: #{tpu_custom_call.1} parent=87 // pred_check_branch
          %714 = sbr.rel (%p712) target = $region108
        $region107: #{tpu_custom_call.1} parent=87 // pred_region
          %715 = dma.done [#allocation14], 16
        $region108: #{tpu_custom_call.1} parent=87 // pred_fallthru
          _
        %p716 = pneg %p70
        %p717 = pneg %p67
        %p718 = pneg %p91
        %p719 = pneg %p88
        %p720 = pneg %p112
        %p721 = pneg %p109
        %p722 = pneg %p133
        %p723 = pneg %p130
        %p724 = pneg %p154
        %p725 = pneg %p151
        %p726 = pneg %p175
        %p727 = pneg %p172
        %p728 = pneg %p196
        %p729 = pneg %p193
        %p730 = pneg %p217
        %p731 = pneg %p214
        %p732 = pneg %p238
        %p733 = pneg %p235
        %p734 = pneg %p259
        %p735 = pneg %p256
        %p736 = pneg %p280
        %p737 = pneg %p277
        %p738 = pneg %p301
        %p739 = pneg %p298
        %p740 = pneg %p322
        %p741 = pneg %p319
        %s742 = ssub.s32 1, %s46
        %s743 = smul.u32 %s47, %s742
        %s744 = smul.u32 2, %s743
        %p745 = scmp.lt.s32.totalorder %s744, 1
        %s746 = scalar_select %p745, %s744, 1
        %s747 = smul.addr %s746, 4
        %s748 = scalar_lea.vmem %s13, %s747
        %p749 = pneg %p352
        %p750 = pneg %p349
        %s751 = ssub.s32 1, %s46
        %s752 = smul.u32 %s47, %s751
        %s753 = smul.u32 2, %s752
        %p754 = scmp.lt.s32.totalorder %s753, 1
        %s755 = scalar_select %p754, %s753, 1
        %s756 = scalar_lea.vmem %s14, %s755
        %p757 = pneg %p382
        %p758 = pneg %p379
        %s759 = smul.u32 %s47, %s46
        %s760 = smul.u32 2, %s759
        %p761 = scmp.lt.s32.totalorder %s760, 1
        %s762 = scalar_select %p761, %s760, 1
        %s763 = smul.addr %s762, 4
        %s764 = scalar_lea.vmem %s15, %s763
        %p765 = pneg %p410
        %p766 = pneg %p407
        %s767 = smul.u32 %s47, %s46
        %s768 = smul.u32 2, %s767
        %p769 = scmp.lt.s32.totalorder %s768, 1
        %s770 = scalar_select %p769, %s768, 1
        %s771 = scalar_lea.vmem %s16, %s770
        %p772 = pneg %p438
        %p773 = pneg %p435
        %p774 = pneg %p466
        %p775 = pneg %p463
        %s776 = sand.u32 %s453, 1
        %s777 = scalar_lea.sflag [#allocation9], %s776
        %s778 = sand.u32 %s453, 1
        %s779 = smul.addr %s778, 16
        %s780 = scalar_lea.vmem [#allocation16], %s779
        %p781 = pneg %p494
        %p782 = pneg %p491
        %s783 = sand.u32 %s42, 1
        %s784 = scalar_lea.sflag [#allocation18], %s783
        %s785 = sand.u32 %s481, 1
        %s786 = smul.addr %s785, 16
        %s787 = scalar_lea.vmem [#allocation17], %s786
        %p788 = pneg %p522
        %p789 = pneg %p519
        %s790 = sand.u32 %s42, 1
        %s791 = scalar_lea.sflag [#allocation18], %s790
        %s792 = sand.u32 %s509, 1
        %s793 = smul.addr %s792, 16
        %s794 = scalar_lea.vmem [#allocation19], %s793
        %p795 = pneg %p543
        %p796 = pneg %p540
        %s797 = ssub.s32 1, %s46
        %s798 = smul.u32 %s47, %s797
        %s799 = smul.u32 2, %s798
        %p800 = scmp.lt.s32.totalorder %s799, 1
        %s801 = scalar_select %p800, %s799, 1
        %s802 = smul.addr %s801, 4
        %s803 = scalar_lea.vmem %s13, %s802
        %s804 = ssub.s32 1, %s46
        %s805 = smul.u32 %s47, %s804
        %s806 = smul.u32 2, %s805
        %s807 = ssub.s32 1, %s46
        %s808 = smul.u32 %s47, %s807
        %s809 = smul.u32 2, %s808
        %p810 = scmp.lt.s32.totalorder %s809, 1
        %s811 = scalar_select %p810, %s809, 1
        %s812 = scalar_lea.vmem %s14, %s811
        %s813 = ssub.s32 1, %s46
        %s814 = smul.u32 %s47, %s813
        %s815 = smul.u32 2, %s814
        %s816 = smul.u32 %s47, %s46
        %s817 = smul.u32 2, %s816
        %p818 = scmp.lt.s32.totalorder %s817, 1
        %s819 = scalar_select %p818, %s817, 1
        %s820 = smul.addr %s819, 4
        %s821 = scalar_lea.vmem %s15, %s820
        %s822 = smul.u32 %s47, %s46
        %s823 = smul.u32 2, %s822
        %s824 = smul.u32 %s47, %s46
        %s825 = smul.u32 2, %s824
        %p826 = scmp.lt.s32.totalorder %s825, 1
        %s827 = scalar_select %p826, %s825, 1
        %s828 = scalar_lea.vmem %s16, %s827
        %s829 = smul.u32 %s47, %s46
        %s830 = smul.u32 2, %s829
        %s831 = smul.u32 %s47, %s46
        %s832 = smul.u32 2, %s831
        %s833 = smul.u32 %s47, %s46
        %s834 = smul.u32 2, %s833
        %s835 = smul.u32 %s47, %s46
        %s836 = smul.u32 2, %s835
        %p838 = scmp.eq.s32.totalorder %s46, 0
        %p839 = scmp.eq.s32.totalorder %s47, 0
        %p840 = pnand %p838, %p839
        %p841 = pneg %p840
        // Predicated region
        $region109: #{tpu_custom_call.1} parent=87 // pred_check
          _
        $region110: #{tpu_custom_call.1} parent=87 // pred_check_branch
          %843 = sbr.rel (%p840) target = $region112
        $region111: #{tpu_custom_call.1} parent=87 // pred_region
          %v844 = vld [vmem:[#allocation7] sm:$0xff]
          %v845 = vld [vmem:[#allocation12] sm:$0xff]
          %v846 = vld [vmem:[#allocation12 + $0x8] sm:$0xff]
          %v847 = vld [vmem:[#allocation13] sm:$0x1]
          %v849 = vlaneseq
          %v850 = vshrl.u32 %v849, 7
          %v851 = vsub.s32 0, %v850
          %v852 = vrot.slane %v847, %v851
          %vm854 = vcmask 130048
          %v856 = vsel %vm854, %v844, 0
          %858 = vmatprep.subr.mxu0 0.0
          %859 = vmatpush1.msra.mxu0 0.0
          %860 = vmatprep.subr.mxu0 0.0
          %861 = vmatpush1.msra.mxu0 0.0
          %862 = vmatprep.subr.mxu0 0.0
          %863 = vmatpush1.msra.mxu0 0.0
          %864 = vmatprep.subr.mxu0 0.0
          %865 = vmatpush1.msra.mxu0 0.0
          %866 = vmatprep.subr.mxu0 0.0
          %867 = vmatpush1.msra.mxu0 0.0
          %868 = vmatprep.subr.mxu0 0.0
          %869 = vmatpush1.msra.mxu0 0.0
          %870 = vmatprep.subr.mxu0 0.0
          %871 = vmatpush1.msra.mxu0 0.0
          %872 = vmatprep.subr.mxu0 0.0
          %873 = vmatpush1.msra.mxu0 0.0
          %874 = vmatprep.subr.mxu0 0.0
          %875 = vmatpush1.msra.mxu0 0.0
          %876 = vmatprep.subr.mxu0 0.0
          %877 = vmatpush1.msra.mxu0 0.0
          %878 = vmatprep.subr.mxu0 0.0
          %879 = vmatpush1.msra.mxu0 0.0
          %880 = vmatprep.subr.mxu0 0.0
          %881 = vmatpush1.msra.mxu0 0.0
          %882 = vmatprep.subr.mxu0 0.0
          %883 = vmatpush1.msra.mxu0 0.0
          %884 = vmatprep.subr.mxu0 0.0
          %885 = vmatpush1.msra.mxu0 0.0
          %886 = vmatprep.subr.mxu0 0.0
          %887 = vmatpush1.msra.mxu0 %v846
          %888 = vmatprep.subr.mxu0 0.0
          %889 = vmatpush1.msra.mxu0 %v845
          %890 = vmatprep.subr.mxu0 0.0
          %891 = vmatpush2.msra.mxu0 0.0
          %892 = vmatprep.subr.mxu0 0.0
          %893 = vmatpush2.msra.mxu0 0.0
          %894 = vmatprep.subr.mxu0 0.0
          %895 = vmatpush2.msra.mxu0 0.0
          %896 = vmatprep.subr.mxu0 0.0
          %897 = vmatpush2.msra.mxu0 0.0
          %898 = vmatprep.subr.mxu0 0.0
          %899 = vmatpush2.msra.mxu0 0.0
          %900 = vmatprep.subr.mxu0 0.0
          %901 = vmatpush2.msra.mxu0 0.0
          %902 = vmatprep.subr.mxu0 0.0
          %903 = vmatpush2.msra.mxu0 0.0
          %904 = vmatprep.subr.mxu0 0.0
          %905 = vmatpush2.msra.mxu0 0.0
          %906 = vmatprep.subr.mxu0 0.0
          %907 = vmatpush2.msra.mxu0 0.0
          %908 = vmatprep.subr.mxu0 0.0
          %909 = vmatpush2.msra.mxu0 0.0
          %910 = vmatprep.subr.mxu0 0.0
          %911 = vmatpush2.msra.mxu0 0.0
          %912 = vmatprep.subr.mxu0 0.0
          %913 = vmatpush2.msra.mxu0 0.0
          %914 = vmatprep.subr.mxu0 0.0
          %915 = vmatpush2.msra.mxu0 0.0
          %916 = vmatprep.subr.mxu0 0.0
          %917 = vmatpush2.msra.mxu0 0.0
          %918 = vmatprep.subr.mxu0 0.0
          %919 = vmatpush2.msra.mxu0 0.0
          %920 = vmatprep.subr.mxu0 0.0
          %921 = vmatpush2.msra.mxu0 0.0
          %922 = vmatprep.mubr.f32.mxu0 0.0
          %923 = vmatmul.mubr.f32.gmra.mxu0 %v856
          %v924 = vpop.f32.mrf.mxu0
          %v925 = vadd.f32 %v852, %v924
          %v926 = vpop.f32.mrf.mxu0
          %927 = vdwg.mxu0
          %v928 = vrot.slane %v925, 4
          %v929 = vadd.f32 %v925, %v928
          %v930 = vrot.slane %v929, 2
          %v931 = vadd.f32 %v929, %v930
          %v932 = vrot.slane %v931, 1
          %v933 = vadd.f32 %v931, %v932
          %v934 = vrcp.pop 8.0
          %v935 = vmul.f32 %v933, %v934
          %v936 = vsub.f32 %v925, %v935
          %v937 = vmul.f32 %v936, %v936
          %v938 = vrot.slane %v937, 4
          %v939 = vadd.f32 %v937, %v938
          %v940 = vrot.slane %v939, 2
          %v941 = vadd.f32 %v939, %v940
          %v942 = vrot.slane %v941, 1
          %v943 = vadd.f32 %v941, %v942
          %v944 = vmul.f32 %v943, %v934
          %v945 = vadd.f32 %v944, 0.001
          %v946 = vrsqrt.pop %v945
          %v947 = vmul.f32 %v936, %v946
          %v948 = vld [vmem:[%s5] sm:$0x1]
          %v950 = vlaneseq
          %v951 = vshrl.u32 %v950, 7
          %v952 = vsub.s32 0, %v951
          %v953 = vrot.slane %v948, %v952
          %v955 = vmul.f32 %v947, %v953
          %v956 = vld [vmem:[#allocation15] sm:$0x1]
          %v958 = vlaneseq
          %v959 = vshrl.u32 %v958, 7
          %v960 = vsub.s32 0, %v959
          %v961 = vrot.slane %v956, %v960
          %v963 = vadd.f32 %v955, %v961
          %v964 = vmax.f32 %v963, 0.0
          %965 = vrot.lane.b32.xlu0 %v844, 32
          %v966 = vpop.permute.xlu0 %965
          %vm968 = vcmask 261120
          %v969 = vsel %vm968, %v964, %v966
          %v970 = vpack.c.bf16 %v969, %v969
          %vm971 = vcmask 388096
          %972 = vst.msk [vmem:[#allocation2] sm:$0xf] %vm971, %v970
          %974 = vrot.lane.b32.xlu0 %v964, 32
          %v975 = vpop.permute.xlu0 %974
          %v977 = vsel %vm968, %v975, %v966
          %v978 = vpack.c.bf16 %v977, %v977
          %979 = vst.msk [vmem:[#allocation3] sm:$0xf] %vm971, %v978
          %vm980 = vcmask 7168
          %981 = vst.msk [vmem:[#allocation4] sm:$0xff] %vm980, -inf
          %982 = vst.msk [vmem:[#allocation5] sm:$0xff] %vm980, 0.0
          %983 = vrot.lane.b32.xlu0 %v964, 96
          %v984 = vpop.permute.xlu0 %983
          %v986 = vsel %vm968, %v984, %v966
          %987 = vrot.lane.b32.xlu0 %v964, 64
          %v988 = vpop.permute.xlu0 %987
          %v990 = vsel %vm968, %v988, %v966
          %v991 = vld [vmem:[%s7] sm:$0xff]
          %v992 = vld [vmem:[%s7 + $0x8] sm:$0xff]
          %v993 = vld [vmem:[%s7 + $0x10] sm:$0xff]
          %v994 = vld [vmem:[%s7 + $0x18] sm:$0xff]
          %v995 = vld [vmem:[%s7 + $0x20] sm:$0xff]
          %v996 = vld [vmem:[%s7 + $0x28] sm:$0xff]
          %v997 = vld [vmem:[%s8] sm:$0x1]
          %v999 = vlaneseq
          %v1000 = vshrl.u32 %v999, 7
          %v1001 = vsub.s32 0, %v1000
          %v1002 = vrot.slane %v997, %v1001
          %vm1004 = vcmask 392192
          %v1006 = vsel %vm1004, %v986, 0
          %1008 = vmatprep.subr.mxu0 0.0
          %1009 = vmatpush1.msra.mxu0 0.0
          %1010 = vmatprep.subr.mxu0 0.0
          %1011 = vmatpush1.msra.mxu0 0.0
          %1012 = vmatprep.subr.mxu0 0.0
          %1013 = vmatpush1.msra.mxu0 0.0
          %1014 = vmatprep.subr.mxu0 0.0
          %1015 = vmatpush1.msra.mxu0 0.0
          %1016 = vmatprep.subr.mxu0 0.0
          %1017 = vmatpush1.msra.mxu0 0.0
          %1018 = vmatprep.subr.mxu0 0.0
          %1019 = vmatpush1.msra.mxu0 0.0
          %1020 = vmatprep.subr.mxu0 0.0
          %1021 = vmatpush1.msra.mxu0 0.0
          %1022 = vmatprep.subr.mxu0 0.0
          %1023 = vmatpush1.msra.mxu0 0.0
          %1024 = vmatprep.subr.mxu0 0.0
          %1025 = vmatpush1.msra.mxu0 0.0
          %1026 = vmatprep.subr.mxu0 0.0
          %1027 = vmatpush1.msra.mxu0 0.0
          %1028 = vmatprep.subr.mxu0 0.0
          %1029 = vmatpush1.msra.mxu0 %v996
          %1030 = vmatprep.subr.mxu0 0.0
          %1031 = vmatpush1.msra.mxu0 %v995
          %1032 = vmatprep.subr.mxu0 0.0
          %1033 = vmatpush1.msra.mxu0 %v994
          %1034 = vmatprep.subr.mxu0 0.0
          %1035 = vmatpush1.msra.mxu0 %v993
          %1036 = vmatprep.subr.mxu0 0.0
          %1037 = vmatpush1.msra.mxu0 %v992
          %1038 = vmatprep.subr.mxu0 0.0
          %1039 = vmatpush1.msra.mxu0 %v991
          %1040 = vmatprep.subr.mxu0 0.0
          %1041 = vmatpush2.msra.mxu0 0.0
          %1042 = vmatprep.subr.mxu0 0.0
          %1043 = vmatpush2.msra.mxu0 0.0
          %1044 = vmatprep.subr.mxu0 0.0
          %1045 = vmatpush2.msra.mxu0 0.0
          %1046 = vmatprep.subr.mxu0 0.0
          %1047 = vmatpush2.msra.mxu0 0.0
          %1048 = vmatprep.subr.mxu0 0.0
          %1049 = vmatpush2.msra.mxu0 0.0
          %1050 = vmatprep.subr.mxu0 0.0
          %1051 = vmatpush2.msra.mxu0 0.0
          %1052 = vmatprep.subr.mxu0 0.0
          %1053 = vmatpush2.msra.mxu0 0.0
          %1054 = vmatprep.subr.mxu0 0.0
          %1055 = vmatpush2.msra.mxu0 0.0
          %1056 = vmatprep.subr.mxu0 0.0
          %1057 = vmatpush2.msra.mxu0 0.0
          %1058 = vmatprep.subr.mxu0 0.0
          %1059 = vmatpush2.msra.mxu0 0.0
          %1060 = vmatprep.subr.mxu0 0.0
          %1061 = vmatpush2.msra.mxu0 0.0
          %1062 = vmatprep.subr.mxu0 0.0
          %1063 = vmatpush2.msra.mxu0 0.0
          %1064 = vmatprep.subr.mxu0 0.0
          %1065 = vmatpush2.msra.mxu0 0.0
          %1066 = vmatprep.subr.mxu0 0.0
          %1067 = vmatpush2.msra.mxu0 0.0
          %1068 = vmatprep.subr.mxu0 0.0
          %1069 = vmatpush2.msra.mxu0 0.0
          %1070 = vmatprep.subr.mxu0 0.0
          %1071 = vmatpush2.msra.mxu0 0.0
          %1072 = vmatprep.mubr.f32.mxu0 0.0
          %1073 = vmatmul.mubr.f32.gmra.mxu0 %v1006
          %v1074 = vpop.f32.mrf.mxu0
          %v1075 = vadd.f32 %v1002, %v1074
          %v1076 = vpop.f32.mrf.mxu0
          %1077 = vdwg.mxu0
          %v1078 = vmul.f32 %v1075, 1.442695
          %v1079 = vpow.pop %v1078
          %v1080 = vld [vmem:[#allocation10] sm:$0xff]
          %1082 = vrot.lane.b32.xlu0 %v1080, 32
          %v1083 = vpop.permute.xlu0 %1082
          %v1085 = vmul.f32 %v1079, %v1083
          %1087 = vrot.lane.b32.xlu0 %v1085, 96
          %v1088 = vpop.permute.xlu0 %1087
          %v1090 = vadd.f32 %v1075, %v1088
          %v1091 = vmul.f32 %v1090, 1.442695
          %v1092 = vpow.pop %v1091
          %v1093 = vld [vmem:[%s9] sm:$0xff]
          %v1094 = vld [vmem:[%s9 + $0x8] sm:$0xff]
          %v1095 = vld [vmem:[%s9 + $0x10] sm:$0xff]
          %v1096 = vld [vmem:[%s9 + $0x18] sm:$0xff]
          %v1097 = vld [vmem:[%s9 + $0x20] sm:$0xff]
          %v1098 = vld [vmem:[%s9 + $0x28] sm:$0xff]
          %v1099 = vld [vmem:[%s10] sm:$0x1]
          %v1101 = vlaneseq
          %v1102 = vshrl.u32 %v1101, 7
          %v1103 = vsub.s32 0, %v1102
          %v1104 = vrot.slane %v1099, %v1103
          %v1107 = vsel %vm1004, %v990, 0
          %1109 = vmatprep.subr.mxu0 0.0
          %1110 = vmatpush1.msra.mxu0 0.0
          %1111 = vmatprep.subr.mxu0 0.0
          %1112 = vmatpush1.msra.mxu0 0.0
          %1113 = vmatprep.subr.mxu0 0.0
          %1114 = vmatpush1.msra.mxu0 0.0
          %1115 = vmatprep.subr.mxu0 0.0
          %1116 = vmatpush1.msra.mxu0 0.0
          %1117 = vmatprep.subr.mxu0 0.0
          %1118 = vmatpush1.msra.mxu0 0.0
          %1119 = vmatprep.subr.mxu0 0.0
          %1120 = vmatpush1.msra.mxu0 0.0
          %1121 = vmatprep.subr.mxu0 0.0
          %1122 = vmatpush1.msra.mxu0 0.0
          %1123 = vmatprep.subr.mxu0 0.0
          %1124 = vmatpush1.msra.mxu0 0.0
          %1125 = vmatprep.subr.mxu0 0.0
          %1126 = vmatpush1.msra.mxu0 0.0
          %1127 = vmatprep.subr.mxu0 0.0
          %1128 = vmatpush1.msra.mxu0 0.0
          %1129 = vmatprep.subr.mxu0 0.0
          %1130 = vmatpush1.msra.mxu0 %v1098
          %1131 = vmatprep.subr.mxu0 0.0
          %1132 = vmatpush1.msra.mxu0 %v1097
          %1133 = vmatprep.subr.mxu0 0.0
          %1134 = vmatpush1.msra.mxu0 %v1096
          %1135 = vmatprep.subr.mxu0 0.0
          %1136 = vmatpush1.msra.mxu0 %v1095
          %1137 = vmatprep.subr.mxu0 0.0
          %1138 = vmatpush1.msra.mxu0 %v1094
          %1139 = vmatprep.subr.mxu0 0.0
          %1140 = vmatpush1.msra.mxu0 %v1093
          %1141 = vmatprep.subr.mxu0 0.0
          %1142 = vmatpush2.msra.mxu0 0.0
          %1143 = vmatprep.subr.mxu0 0.0
          %1144 = vmatpush2.msra.mxu0 0.0
          %1145 = vmatprep.subr.mxu0 0.0
          %1146 = vmatpush2.msra.mxu0 0.0
          %1147 = vmatprep.subr.mxu0 0.0
          %1148 = vmatpush2.msra.mxu0 0.0
          %1149 = vmatprep.subr.mxu0 0.0
          %1150 = vmatpush2.msra.mxu0 0.0
          %1151 = vmatprep.subr.mxu0 0.0
          %1152 = vmatpush2.msra.mxu0 0.0
          %1153 = vmatprep.subr.mxu0 0.0
          %1154 = vmatpush2.msra.mxu0 0.0
          %1155 = vmatprep.subr.mxu0 0.0
          %1156 = vmatpush2.msra.mxu0 0.0
          %1157 = vmatprep.subr.mxu0 0.0
          %1158 = vmatpush2.msra.mxu0 0.0
          %1159 = vmatprep.subr.mxu0 0.0
          %1160 = vmatpush2.msra.mxu0 0.0
          %1161 = vmatprep.subr.mxu0 0.0
          %1162 = vmatpush2.msra.mxu0 0.0
          %1163 = vmatprep.subr.mxu0 0.0
          %1164 = vmatpush2.msra.mxu0 0.0
          %1165 = vmatprep.subr.mxu0 0.0
          %1166 = vmatpush2.msra.mxu0 0.0
          %1167 = vmatprep.subr.mxu0 0.0
          %1168 = vmatpush2.msra.mxu0 0.0
          %1169 = vmatprep.subr.mxu0 0.0
          %1170 = vmatpush2.msra.mxu0 0.0
          %1171 = vmatprep.subr.mxu0 0.0
          %1172 = vmatpush2.msra.mxu0 0.0
          %1173 = vmatprep.mubr.f32.mxu0 0.0
          %1174 = vmatmul.mubr.f32.gmra.mxu0 %v1107
          %v1175 = vpop.f32.mrf.mxu0
          %v1176 = vadd.f32 %v1104, %v1175
          %v1177 = vpop.f32.mrf.mxu0
          %1178 = vdwg.mxu0
          %v1179 = vmax.f32 %v1176, 0.0
          %v1180 = vadd.f32 %v1179, 1.0
          %v1181 = vmul.f32 %v1092, %v1180
          %v1182 = vld [vmem:[%s11] sm:$0xff]
          %v1183 = vld [vmem:[%s11 + $0x8] sm:$0xff]
          %v1184 = vld [vmem:[%s11 + $0x10] sm:$0xff]
          %v1185 = vld [vmem:[%s11 + $0x18] sm:$0xff]
          %v1186 = vld [vmem:[%s11 + $0x20] sm:$0xff]
          %v1187 = vld [vmem:[%s11 + $0x28] sm:$0xff]
          %v1188 = vld [vmem:[%s12] sm:$0x1]
          %v1190 = vlaneseq
          %v1191 = vshrl.u32 %v1190, 7
          %v1192 = vsub.s32 0, %v1191
          %v1193 = vrot.slane %v1188, %v1192
          %v1196 = vsel %vm1004, %v977, 0
          %1198 = vmatprep.subr.mxu0 0.0
          %1199 = vmatpush1.msra.mxu0 0.0
          %1200 = vmatprep.subr.mxu0 0.0
          %1201 = vmatpush1.msra.mxu0 0.0
          %1202 = vmatprep.subr.mxu0 0.0
          %1203 = vmatpush1.msra.mxu0 0.0
          %1204 = vmatprep.subr.mxu0 0.0
          %1205 = vmatpush1.msra.mxu0 0.0
          %1206 = vmatprep.subr.mxu0 0.0
          %1207 = vmatpush1.msra.mxu0 0.0
          %1208 = vmatprep.subr.mxu0 0.0
          %1209 = vmatpush1.msra.mxu0 0.0
          %1210 = vmatprep.subr.mxu0 0.0
          %1211 = vmatpush1.msra.mxu0 0.0
          %1212 = vmatprep.subr.mxu0 0.0
          %1213 = vmatpush1.msra.mxu0 0.0
          %1214 = vmatprep.subr.mxu0 0.0
          %1215 = vmatpush1.msra.mxu0 0.0
          %1216 = vmatprep.subr.mxu0 0.0
          %1217 = vmatpush1.msra.mxu0 0.0
          %1218 = vmatprep.subr.mxu0 0.0
          %1219 = vmatpush1.msra.mxu0 %v1187
          %1220 = vmatprep.subr.mxu0 0.0
          %1221 = vmatpush1.msra.mxu0 %v1186
          %1222 = vmatprep.subr.mxu0 0.0
          %1223 = vmatpush1.msra.mxu0 %v1185
          %1224 = vmatprep.subr.mxu0 0.0
          %1225 = vmatpush1.msra.mxu0 %v1184
          %1226 = vmatprep.subr.mxu0 0.0
          %1227 = vmatpush1.msra.mxu0 %v1183
          %1228 = vmatprep.subr.mxu0 0.0
          %1229 = vmatpush1.msra.mxu0 %v1182
          %1230 = vmatprep.subr.mxu0 0.0
          %1231 = vmatpush2.msra.mxu0 0.0
          %1232 = vmatprep.subr.mxu0 0.0
          %1233 = vmatpush2.msra.mxu0 0.0
          %1234 = vmatprep.subr.mxu0 0.0
          %1235 = vmatpush2.msra.mxu0 0.0
          %1236 = vmatprep.subr.mxu0 0.0
          %1237 = vmatpush2.msra.mxu0 0.0
          %1238 = vmatprep.subr.mxu0 0.0
          %1239 = vmatpush2.msra.mxu0 0.0
          %1240 = vmatprep.subr.mxu0 0.0
          %1241 = vmatpush2.msra.mxu0 0.0
          %1242 = vmatprep.subr.mxu0 0.0
          %1243 = vmatpush2.msra.mxu0 0.0
          %1244 = vmatprep.subr.mxu0 0.0
          %1245 = vmatpush2.msra.mxu0 0.0
          %1246 = vmatprep.subr.mxu0 0.0
          %1247 = vmatpush2.msra.mxu0 0.0
          %1248 = vmatprep.subr.mxu0 0.0
          %1249 = vmatpush2.msra.mxu0 0.0
          %1250 = vmatprep.subr.mxu0 0.0
          %1251 = vmatpush2.msra.mxu0 0.0
          %1252 = vmatprep.subr.mxu0 0.0
          %1253 = vmatpush2.msra.mxu0 0.0
          %1254 = vmatprep.subr.mxu0 0.0
          %1255 = vmatpush2.msra.mxu0 0.0
          %1256 = vmatprep.subr.mxu0 0.0
          %1257 = vmatpush2.msra.mxu0 0.0
          %1258 = vmatprep.subr.mxu0 0.0
          %1259 = vmatpush2.msra.mxu0 0.0
          %1260 = vmatprep.subr.mxu0 0.0
          %1261 = vmatpush2.msra.mxu0 0.0
          %1262 = vmatprep.mubr.f32.mxu0 0.0
          %1263 = vmatmul.mubr.f32.gmra.mxu0 %v1196
          %v1264 = vpop.f32.mrf.mxu0
          %v1265 = vadd.f32 %v1193, %v1264
          %v1266 = vpop.f32.mrf.mxu0
          %1267 = vdwg.mxu0
          %v1268 = vsub.f32 0.0, %v1265
          %v1269 = vmax.f32 %v1268, -60.0
          %v1270 = vmin.f32 %v1269, 60.0
          %v1271 = vmul.f32 %v1270, 1.442695
          %v1272 = vpow.pop %v1271
          %v1273 = vadd.f32 %v1272, 1.0
          %v1274 = vrcp.pop %v1273
          %v1275 = vsub.f32 1.0, %v1274
          %v1276 = vmul.f32 %v1275, %v1181
          %v1277 = vand.u32 2147483647, %v1276
          %v1278 = vsel %vm968, %v1277, 0.0
          %1279 = vadd.xlane.f32.xlu0 %v1278
          %v1280 = vpop.xlane.xlu0 %1279
          %v1281 = vmax.f32 %v1280, 1e-12
          %v1282 = vrcp.pop %v1281
          %v1283 = vmul.f32 1.0, %v1282
          %v1284 = vmul.f32 %v1276, %v1283
          %1286 = vrot.lane.b32.xlu0 %v1092, 64
          %v1287 = vpop.permute.xlu0 %1286
          %1290 = vrot.lane.b32.xlu0 %v1180, 96
          %v1291 = vpop.permute.xlu0 %1290
          %1294 = vrot.lane.b32.xlu0 %v1265, 32
          %v1295 = vpop.permute.xlu0 %1294
          %1298 = vrot.lane.b32.xlu0 %v1284, 64
          %v1299 = vpop.permute.xlu0 %1298
          %1302 = vrot.lane.b32.xlu0 %v1090, 96
          %v1303 = vpop.permute.xlu0 %1302
          %v1305 = vsel %vm968, %v1075, %v1079
          %vm1306 = vcmask 523264
          %v1307 = vsel %vm1306, %v1305, %v1287
          %vm1308 = vcmask 785408
          %v1309 = vsel %vm1308, %v1307, %v1291
          %v1310 = vsel %vm968, %v1181, %v1295
          %v1311 = vsel %vm1306, %v1310, %v1299
          %v1312 = vsel %vm1308, %v1311, %v1303
          %1313 = vst [vmem:[#allocation20] sm:$0xff] %v1309
          %1314 = vst [vmem:[#allocation20 + $0x8] sm:$0xff] %v1312
        $region112: #{tpu_custom_call.1} parent=87 // pred_fallthru
          _
        // Predicated region
        $region113: #{tpu_custom_call.1} parent=87 // pred_check
          %p1315 = pneg %p838
        $region114: #{tpu_custom_call.1} parent=87 // pred_check_branch
          %1317 = sbr.rel (%p1315) target = $region116
        $region115: #{tpu_custom_call.1} parent=87 // pred_region
          %v1318 = vld [vmem:[#allocation2] sm:$0xf]
          %v1319 = vld [vmem:[%s803] sm:$0xff]
          %v1320 = vld [vmem:[%s803 + $0x8] sm:$0xff]
          %v1321 = vld [vmem:[%s803 + $0x10] sm:$0xff]
          %v1322 = vld [vmem:[%s803 + $0x18] sm:$0xff]
          %v1323 = vld [vmem:[%s803 + $0x20] sm:$0xff]
          %v1324 = vld [vmem:[%s803 + $0x28] sm:$0xff]
          %v1325 = vld [vmem:[%s812] sm:$0x3]
          %v1327 = vlaneseq
          %v1328 = vshrl.u32 %v1327, 7
          %v1329 = vsub.s32 0, %v1328
          %v1330 = vrot.slane %v1325, %v1329
          %v1331 = vlaneseq
          %v1332 = vshrl.u32 %v1331, 7
          %v1333 = vsub.s32 1, %v1332
          %v1334 = vrot.slane %v1325, %v1333
          %v1343 = vunpack.c.l.b16 %v1319
          %v1344 = vunpack.c.h.b16 %v1319
          %v1345 = vunpack.c.l.b16 %v1320
          %v1346 = vunpack.c.h.b16 %v1320
          %v1347 = vunpack.c.l.b16 %v1321
          %v1348 = vunpack.c.h.b16 %v1321
          %v1349 = vunpack.c.l.b16 %v1322
          %v1350 = vunpack.c.h.b16 %v1322
          %v1351 = vunpack.c.l.b16 %v1323
          %v1352 = vunpack.c.h.b16 %v1323
          %v1353 = vunpack.c.l.b16 %v1324
          %v1354 = vunpack.c.h.b16 %v1324
          %v1355 = vpack.c.b16 %v1345, %v1343
          %v1356 = vpack.c.b16 %v1346, %v1344
          %v1357 = vpack.c.b16 %v1349, %v1347
          %v1358 = vpack.c.b16 %v1350, %v1348
          %v1359 = vpack.c.b16 %v1353, %v1351
          %v1360 = vpack.c.b16 %v1354, %v1352
          %vm1367 = vcmask 392192
          %v1369 = vsel %vm1367, %v1318, 0
          %1371 = vmatprep.subr.bf16.mxu0 0
          %1372 = vmatpush1.bf16.msra.mxu0 0
          %1373 = vmatprep.subr.bf16.mxu0 0
          %1374 = vmatpush1.bf16.msra.mxu0 0
          %1375 = vmatprep.subr.bf16.mxu0 0
          %1376 = vmatpush1.bf16.msra.mxu0 0
          %1377 = vmatprep.subr.bf16.mxu0 0
          %1378 = vmatpush1.bf16.msra.mxu0 0
          %1379 = vmatprep.subr.bf16.mxu0 0
          %1380 = vmatpush1.bf16.msra.mxu0 0
          %1381 = vmatprep.subr.bf16.mxu0 %v1360
          %1382 = vmatpush1.bf16.msra.mxu0 %v1359
          %1383 = vmatprep.subr.bf16.mxu0 %v1358
          %1384 = vmatpush1.bf16.msra.mxu0 %v1357
          %1385 = vmatprep.subr.bf16.mxu0 %v1356
          %1386 = vmatpush1.bf16.msra.mxu0 %v1355
          %1387 = vmatprep.subr.bf16.mxu0 0
          %1388 = vmatpush2.bf16.msra.mxu0 0
          %1389 = vmatprep.subr.bf16.mxu0 0
          %1390 = vmatpush2.bf16.msra.mxu0 0
          %1391 = vmatprep.subr.bf16.mxu0 0
          %1392 = vmatpush2.bf16.msra.mxu0 0
          %1393 = vmatprep.subr.bf16.mxu0 0
          %1394 = vmatpush2.bf16.msra.mxu0 0
          %1395 = vmatprep.subr.bf16.mxu0 0
          %1396 = vmatpush2.bf16.msra.mxu0 0
          %1397 = vmatprep.subr.bf16.mxu0 0
          %1398 = vmatpush2.bf16.msra.mxu0 0
          %1399 = vmatprep.subr.bf16.mxu0 0
          %1400 = vmatpush2.bf16.msra.mxu0 0
          %1401 = vmatprep.subr.bf16.mxu0 0
          %1402 = vmatpush2.bf16.msra.mxu0 0
          %1403 = vmatprep.mubr.bf16.mxu0 0
          %1404 = vmatmul.mubr.bf16.gmra.mxu0 %v1369
          %v1405 = vpop.f32.mrf.mxu0
          %v1406 = vadd.f32 %v1330, %v1405
          %v1407 = vpop.f32.mrf.mxu0
          %v1408 = vadd.f32 %v1334, %v1407
          %v1409 = vpop.f32.mrf.mxu0
          %v1410 = vpop.f32.mrf.mxu0
          %1411 = vdwg.mxu0
          %s1412 = smul.u32 %s47, 256
          %s1413 = sshra.s32 %s1412, 7
          %s1414 = sand.u32 %s1412, 127
          %s1415 = smul.addr %s1413, 8
          %s1416 = scalar_lea.vmem [#allocation6], %s1415
          %1417 = vst [vmem:[%s1416] sm:$0xff] %v1406
          %1418 = vst [vmem:[%s1416 + $0x8] sm:$0xff] %v1408
          %v1419 = vld [vmem:[#allocation4] sm:$0xff]
          %v1420 = vmax.f32 %v1406, %v1408
          %1421 = vmax.xlane.f32.xlu0 %v1420
          %v1422 = vpop.xlane.xlu0 %1421
          %v1423 = vmax.f32 %v1419, %v1422
          %v1424 = vld [vmem:[#allocation5] sm:$0xff]
          %v1425 = vsub.f32 %v1419, %v1423
          %v1426 = vmul.f32 %v1425, 1.442695
          %v1427 = vpow.pop %v1426
          %v1428 = vmul.f32 %v1424, %v1427
          %1430 = vset.pattern.permute.xlu0 0
          %1431 = vperm.xlu0 %1430, %v1423
          %v1432 = vpop.permute.xlu0 %1431
          %v1434 = vsub.f32 %v1406, %v1432
          %v1435 = vsub.f32 %v1408, %v1432
          %v1436 = vmul.f32 %v1434, 1.442695
          %v1437 = vpow.pop %v1436
          %v1438 = vmul.f32 %v1435, 1.442695
          %v1439 = vpow.pop %v1438
          %v1440 = vadd.f32 %v1437, %v1439
          %1441 = vadd.xlane.f32.xlu0 %v1440
          %v1442 = vpop.xlane.xlu0 %1441
          %v1443 = vadd.f32 %v1428, %v1442
          %vm1444 = vcmask 7168
          %1445 = vst.msk [vmem:[#allocation5] sm:$0xff] %vm1444, %v1443
          %1446 = vst.msk [vmem:[#allocation4] sm:$0xff] %vm1444, %v1423
        $region116: #{tpu_custom_call.1} parent=87 // pred_fallthru
          _
        %p1447 = scmp.eq.s32.totalorder %s46, 1
        // Predicated region
        $region117: #{tpu_custom_call.1} parent=87 // pred_check
          %p1448 = pneg %p1447
        $region118: #{tpu_custom_call.1} parent=87 // pred_check_branch
          %1450 = sbr.rel (%p1448) target = $region120
        $region119: #{tpu_custom_call.1} parent=87 // pred_region
          %s1451 = smul.u32 %s47, 256
          %s1452 = sshra.s32 %s1451, 7
          %s1453 = sand.u32 %s1451, 127
          %s1454 = smul.addr %s1452, 8
          %s1455 = scalar_lea.vmem [#allocation6], %s1454
          %v1456 = vld [vmem:[%s1455] sm:$0xff]
          %v1457 = vld [vmem:[%s1455 + $0x8] sm:$0xff]
          %v1458 = vld [vmem:[#allocation5] sm:$0xff]
          %v1459 = vrcp.pop %v1458
          %v1460 = vmul.f32 1.0, %v1459
          %v1461 = vld [vmem:[#allocation4] sm:$0xff]
          %1463 = vset.pattern.permute.xlu0 0
          %1464 = vperm.xlu0 %1463, %v1461
          %v1465 = vpop.permute.xlu0 %1464
          %v1467 = vsub.f32 %v1456, %v1465
          %v1468 = vsub.f32 %v1457, %v1465
          %v1469 = vmul.f32 %v1467, 1.442695
          %v1470 = vpow.pop %v1469
          %v1471 = vmul.f32 %v1468, 1.442695
          %v1472 = vpow.pop %v1471
          %1474 = vset.pattern.permute.xlu0 0
          %1475 = vperm.xlu0 %1474, %v1460
          %v1476 = vpop.permute.xlu0 %1475
          %v1478 = vmul.f32 %v1470, %v1476
          %v1479 = vmul.f32 %v1472, %v1476
          %1480 = vst [vmem:[%s780] sm:$0xff] %v1478
          %1481 = vst [vmem:[%s780 + $0x8] sm:$0xff] %v1479
          %v1482 = vld [vmem:[%s1] sm:$0xff]
          %1484 = vset.pattern.permute.xlu0 0
          %1485 = vperm.xlu0 %1484, %v1482
          %v1486 = vpop.permute.xlu0 %1485
          %v1488 = vmul.f32 %v1486, %v1478
          %v1489 = vmul.f32 %v1486, %v1479
          %1490 = vst [vmem:[%s787] sm:$0xff] %v1488
          %1491 = vst [vmem:[%s787 + $0x8] sm:$0xff] %v1489
          %v1492 = vld [vmem:[#allocation3] sm:$0xf]
          %v1493 = vld [vmem:[%s821] sm:$0xff]
          %v1494 = vld [vmem:[%s821 + $0x8] sm:$0xff]
          %v1495 = vld [vmem:[%s821 + $0x10] sm:$0xff]
          %v1496 = vld [vmem:[%s821 + $0x18] sm:$0xff]
          %v1497 = vld [vmem:[%s821 + $0x20] sm:$0xff]
          %v1498 = vld [vmem:[%s821 + $0x28] sm:$0xff]
          %v1499 = vld [vmem:[%s828] sm:$0x3]
          %v1501 = vlaneseq
          %v1502 = vshrl.u32 %v1501, 7
          %v1503 = vsub.s32 0, %v1502
          %v1504 = vrot.slane %v1499, %v1503
          %v1505 = vlaneseq
          %v1506 = vshrl.u32 %v1505, 7
          %v1507 = vsub.s32 1, %v1506
          %v1508 = vrot.slane %v1499, %v1507
          %v1517 = vunpack.c.l.b16 %v1493
          %v1518 = vunpack.c.h.b16 %v1493
          %v1519 = vunpack.c.l.b16 %v1494
          %v1520 = vunpack.c.h.b16 %v1494
          %v1521 = vunpack.c.l.b16 %v1495
          %v1522 = vunpack.c.h.b16 %v1495
          %v1523 = vunpack.c.l.b16 %v1496
          %v1524 = vunpack.c.h.b16 %v1496
          %v1525 = vunpack.c.l.b16 %v1497
          %v1526 = vunpack.c.h.b16 %v1497
          %v1527 = vunpack.c.l.b16 %v1498
          %v1528 = vunpack.c.h.b16 %v1498
          %v1529 = vpack.c.b16 %v1519, %v1517
          %v1530 = vpack.c.b16 %v1520, %v1518
          %v1531 = vpack.c.b16 %v1523, %v1521
          %v1532 = vpack.c.b16 %v1524, %v1522
          %v1533 = vpack.c.b16 %v1527, %v1525
          %v1534 = vpack.c.b16 %v1528, %v1526
          %vm1541 = vcmask 392192
          %v1543 = vsel %vm1541, %v1492, 0
          %1545 = vmatprep.subr.bf16.mxu0 0
          %1546 = vmatpush1.bf16.msra.mxu0 0
          %1547 = vmatprep.subr.bf16.mxu0 0
          %1548 = vmatpush1.bf16.msra.mxu0 0
          %1549 = vmatprep.subr.bf16.mxu0 0
          %1550 = vmatpush1.bf16.msra.mxu0 0
          %1551 = vmatprep.subr.bf16.mxu0 0
          %1552 = vmatpush1.bf16.msra.mxu0 0
          %1553 = vmatprep.subr.bf16.mxu0 0
          %1554 = vmatpush1.bf16.msra.mxu0 0
          %1555 = vmatprep.subr.bf16.mxu0 %v1534
          %1556 = vmatpush1.bf16.msra.mxu0 %v1533
          %1557 = vmatprep.subr.bf16.mxu0 %v1532
          %1558 = vmatpush1.bf16.msra.mxu0 %v1531
          %1559 = vmatprep.subr.bf16.mxu0 %v1530
          %1560 = vmatpush1.bf16.msra.mxu0 %v1529
          %1561 = vmatprep.subr.bf16.mxu0 0
          %1562 = vmatpush2.bf16.msra.mxu0 0
          %1563 = vmatprep.subr.bf16.mxu0 0
          %1564 = vmatpush2.bf16.msra.mxu0 0
          %1565 = vmatprep.subr.bf16.mxu0 0
          %1566 = vmatpush2.bf16.msra.mxu0 0
          %1567 = vmatprep.subr.bf16.mxu0 0
          %1568 = vmatpush2.bf16.msra.mxu0 0
          %1569 = vmatprep.subr.bf16.mxu0 0
          %1570 = vmatpush2.bf16.msra.mxu0 0
          %1571 = vmatprep.subr.bf16.mxu0 0
          %1572 = vmatpush2.bf16.msra.mxu0 0
          %1573 = vmatprep.subr.bf16.mxu0 0
          %1574 = vmatpush2.bf16.msra.mxu0 0
          %1575 = vmatprep.subr.bf16.mxu0 0
          %1576 = vmatpush2.bf16.msra.mxu0 0
          %1577 = vmatprep.mubr.bf16.mxu0 0
          %1578 = vmatmul.mubr.bf16.gmra.mxu0 %v1543
          %v1579 = vpop.f32.mrf.mxu0
          %v1580 = vadd.f32 %v1504, %v1579
          %v1581 = vpop.f32.mrf.mxu0
          %v1582 = vadd.f32 %v1508, %v1581
          %v1583 = vpop.f32.mrf.mxu0
          %v1584 = vpop.f32.mrf.mxu0
          %1585 = vdwg.mxu0
          %1586 = vst [vmem:[%s794] sm:$0xff] %v1580
          %1587 = vst [vmem:[%s794 + $0x8] sm:$0xff] %v1582
        $region120: #{tpu_custom_call.1} parent=87 // pred_fallthru
          _
        %s1588 = sand.u32 %s453, 1
        %s1589 = scalar_lea.sflag [#allocation9], %s1588
        %s1590 = sand.u32 %s453, 1
        %s1591 = smul.addr %s1590, 16
        %s1592 = scalar_lea.vmem [#allocation16], %s1591
        %s1593 = sand.u32 %s42, 1
        %s1594 = scalar_lea.sflag [#allocation18], %s1593
        %s1595 = sand.u32 %s481, 1
        %s1596 = smul.addr %s1595, 16
        %s1597 = scalar_lea.vmem [#allocation17], %s1596
        %s1598 = sand.u32 %s42, 1
        %s1599 = scalar_lea.sflag [#allocation18], %s1598
        %s1600 = sand.u32 %s509, 1
        %s1601 = smul.addr %s1600, 16
        %s1602 = scalar_lea.vmem [#allocation19], %s1601
        // Predicated region
        $region121: #{tpu_custom_call.1} parent=87 // pred_check
          %p1603 = pneg %p463
        $region122: #{tpu_custom_call.1} parent=87 // pred_check_branch
          %1605 = sbr.rel (%p1603) target = $region124
        $region123: #{tpu_custom_call.1} parent=87 // pred_region
          %s1606 = smul.u32 %s47, %s46
          %s1607 = smul.u32 2, %s1606
          %s1609 = ssub.s32 256, 256
          %1610 = vsyncadd %s1589, %s1609
          %s1611 = smul.addr %s1607, 128
          %s1612 = scalar_lea.hbm %s17, %s1611
          %s1614 = sshll.u32 %s1592, 4
          %s1615 = int_to_ptr.vmem [resolvable:$true] %s1614
          %1617 = dma.vmem_to_hbm [thread:$0]  %s1615, 256, %s1612, %s1589
        $region124: #{tpu_custom_call.1} parent=87 // pred_fallthru
          _
        // Predicated region
        $region125: #{tpu_custom_call.1} parent=87 // pred_check
          %p1618 = pneg %p491
        $region126: #{tpu_custom_call.1} parent=87 // pred_check_branch
          %1620 = sbr.rel (%p1618) target = $region128
        $region127: #{tpu_custom_call.1} parent=87 // pred_region
          %s1621 = smul.u32 %s47, %s46
          %s1622 = smul.u32 2, %s1621
          %s1624 = ssub.s32 256, 256
          %1625 = vsyncadd %s1594, %s1624
          %s1626 = smul.addr %s1622, 128
          %s1627 = scalar_lea.hbm %s18, %s1626
          %s1629 = sshll.u32 %s1597, 4
          %s1630 = int_to_ptr.vmem [resolvable:$true] %s1629
          %1632 = dma.vmem_to_hbm [thread:$0]  %s1630, 256, %s1627, %s1594
        $region128: #{tpu_custom_call.1} parent=87 // pred_fallthru
          _
        // Predicated region
        $region129: #{tpu_custom_call.1} parent=87 // pred_check
          %p1633 = pneg %p519
        $region130: #{tpu_custom_call.1} parent=87 // pred_check_branch
          %1635 = sbr.rel (%p1633) target = $region132
        $region131: #{tpu_custom_call.1} parent=87 // pred_region
          %s1636 = smul.u32 %s47, %s46
          %s1637 = smul.u32 2, %s1636
          %s1639 = ssub.s32 256, 256
          %1640 = vsyncadd %s1599, %s1639
          %s1641 = smul.addr %s1637, 128
          %s1642 = scalar_lea.hbm %s19, %s1641
          %s1644 = sshll.u32 %s1602, 4
          %s1645 = int_to_ptr.vmem [resolvable:$true] %s1644
          %1647 = dma.vmem_to_hbm [thread:$0]  %s1645, 256, %s1642, %s1599
        $region132: #{tpu_custom_call.1} parent=87 // pred_fallthru
          _
        // Predicated region
        $region133: #{tpu_custom_call.1} parent=87 // pred_check
          %p1648 = pneg %p540
        $region134: #{tpu_custom_call.1} parent=87 // pred_check_branch
          %1650 = sbr.rel (%p1648) target = $region136
        $region135: #{tpu_custom_call.1} parent=87 // pred_region
          %s1652 = ssub.s32 256, 256
          %1653 = vsyncadd [#allocation21], %s1652
          %s1655 = sshll.u32 [#allocation20], 4
          %s1656 = int_to_ptr.vmem [resolvable:$true] %s1655
          %1658 = dma.vmem_to_hbm [thread:$0]  %s1656, 256, %s20, [#allocation21]
        $region136: #{tpu_custom_call.1} parent=87 // pred_fallthru
          _
        // Predicated region
        $region137: #{tpu_custom_call.1} parent=87 // pred_check
          %p1659 = pneg %p540
        $region138: #{tpu_custom_call.1} parent=87 // pred_check_branch
          %1661 = sbr.rel (%p1659) target = $region140
        $region139: #{tpu_custom_call.1} parent=87 // pred_region
          %1662 = dma.done [#allocation21], 256
        $region140: #{tpu_custom_call.1} parent=87 // pred_fallthru
          _
      $region88: #{tpu_custom_call.1} parent=5 // pred_fallthru
        _
      %p1663 = scmp.le.s32.totalorder 2, %s37
      // Predicated region
      $region141: #{tpu_custom_call.1} parent=5 // pred_check
        %p1664 = pneg %p1663
      $region142: #{tpu_custom_call.1} parent=5 // pred_check_branch
        %1666 = sbr.rel (%p1664) target = $region144
      $region143: #{tpu_custom_call.1} parent=5 // pred_region
        %s1667 = ssub.s32 %s37, 2
        // Predicated region
        $region145: #{tpu_custom_call.1} parent=143 // pred_check
          %p1668 = pneg %p469
        $region146: #{tpu_custom_call.1} parent=143 // pred_check_branch
          %1670 = sbr.rel (%p1668) target = $region148
        $region147: #{tpu_custom_call.1} parent=143 // pred_region
          %s1671 = sand.u32 %s454, 1
          %s1672 = scalar_lea.sflag [#allocation9], %s1671
          %s1673 = sand.u32 %s454, 1
          %s1674 = smul.addr %s1673, 16
          %s1675 = scalar_lea.vmem [#allocation16], %s1674
          %1676 = dma.done %s1672, 256
        $region148: #{tpu_custom_call.1} parent=143 // pred_fallthru
          _
        // Predicated region
        $region149: #{tpu_custom_call.1} parent=143 // pred_check
          %p1677 = pneg %p497
        $region150: #{tpu_custom_call.1} parent=143 // pred_check_branch
          %1679 = sbr.rel (%p1677) target = $region152
        $region151: #{tpu_custom_call.1} parent=143 // pred_region
          %s1680 = sand.u32 %s43, 1
          %s1681 = scalar_lea.sflag [#allocation18], %s1680
          %s1682 = sand.u32 %s482, 1
          %s1683 = smul.addr %s1682, 16
          %s1684 = scalar_lea.vmem [#allocation17], %s1683
          %1685 = dma.done %s1681, 256
        $region152: #{tpu_custom_call.1} parent=143 // pred_fallthru
          _
        // Predicated region
        $region153: #{tpu_custom_call.1} parent=143 // pred_check
          %p1686 = pneg %p525
        $region154: #{tpu_custom_call.1} parent=143 // pred_check_branch
          %1688 = sbr.rel (%p1686) target = $region156
        $region155: #{tpu_custom_call.1} parent=143 // pred_region
          %s1689 = sand.u32 %s43, 1
          %s1690 = scalar_lea.sflag [#allocation18], %s1689
          %s1691 = sand.u32 %s510, 1
          %s1692 = smul.addr %s1691, 16
          %s1693 = scalar_lea.vmem [#allocation19], %s1692
          %1694 = dma.done %s1690, 256
        $region156: #{tpu_custom_call.1} parent=143 // pred_fallthru
          _
      $region144: #{tpu_custom_call.1} parent=5 // pred_fallthru
        _
    $region6: #{tpu_custom_call.1} parent=1 // loop_footer
      %s41 = sadd.s32 1, %s37
    $region7: #{tpu_custom_call.1} parent=1 // loop_footer_branch
      %36 = sbr.rel target = $region3
    $region8: #{tpu_custom_call.1} parent=1 // loop_exit
      _
    %1695 = vsyncpa [#allocation8], 1
    %s1696 = scalar_lea.sflag [#allocation8], 1
    %1697 = vsyncpa %s1696, 1
    %1698 = vsyncpa [#allocation11], 1
    %1699 = vsyncpa [#allocation14], 1
    %1700 = vsyncpa [#allocation9], 1
    %s1701 = scalar_lea.sflag [#allocation9], 1
    %1702 = vsyncpa %s1701, 1
    %1703 = vsyncpa [#allocation18], 1
    %s1704 = scalar_lea.sflag [#allocation18], 1
    %1705 = vsyncpa %s1704, 1
    %1706 = vsyncpa [#allocation21], 1

</llo_original>
